<compile_context>
chip_gen: v6e
topology: v6e:2x2x1
jax: 0.10.0
libtpu: 0.0.40
codegen_flags: <defaults>
</compile_context>

<pallas_src>
import functools

import jax
import jax.numpy as jnp
from jax.experimental import pallas as pl
from jax.experimental.pallas import tpu as pltpu


LANE = 128


def _ru(n, m=LANE):
    return ((n + m - 1) // m) * m


def _apply_act(y, act):
    if act is None:
        return y
    if act == "relu":
        return jnp.maximum(y, 0.0)
    if act == "sigmoid":
        return jax.nn.sigmoid(y)
    if act == "tanh":
        return jnp.tanh(y)
    raise ValueError(f"unknown activation: {act}")


# ------------------------------- kernel --------------------------------------


def _vae_kernel(*refs, n_enc, n_dec, enc_act, dec_act, final_act,
                compute_dtype, p_in, p_z):
    """Fused VAE forward on one [tm, p_in + p_z] padded batch tile.

    refs layout:
      [xin,                                     # [tm, p_in + p_z] = [x_pad | eps_pad]
       enc_w0, enc_b0, ..., enc_w{n-1}, enc_b{n-1},
       head_w, head_b,                          # fused [mean | logvar] head
       dec_w0, dec_b0, ..., last_w, last_b,
       out]                                     # [tm, 3*p_z + p_in] output slab
    """
    n_params = 2 * (n_enc + 1 + n_dec + 1)
    xin_ref = refs[0]
    params = refs[1:1 + n_params]
    out_ref = refs[1 + n_params]

    def linear(h, w_ref, b_ref, act):
        # MXU matmul (bf16 or f32 operands) with f32 accumulation; bias add and
        # activation stay in f32.
        y = jnp.dot(h.astype(compute_dtype), w_ref[...],
                    preferred_element_type=jnp.float32)
        y = y + b_ref[...]
        return _apply_act(y, act)

    xin = xin_ref[...]
    h = xin[:, :p_in]                       # x (padded), already compute_dtype
    eps = xin[:, p_in:].astype(jnp.float32)  # eps (padded)

    idx = 0
    # Encoder stack.
    for _ in range(n_enc):
        h = linear(h, params[idx], params[idx + 1], enc_act)
        idx += 2

    # Fused latent heads: one matmul -> [tm, 2*p_z], split at the lane-128 boundary.
    mv = linear(h, params[idx], params[idx + 1], None)
    idx += 2
    mean = mv[:, :p_z]
    logvar = mv[:, p_z:]

    # Reparameterization: z = eps * exp(0.5*logvar) + mean   (EUP exp).
    std = jnp.exp(0.5 * logvar)
    z = eps * std + mean

    # Decoder hidden stack + final layer.
    d = z
    for _ in range(n_dec):
        d = linear(d, params[idx], params[idx + 1], dec_act)
        idx += 2
    recon = linear(d, params[idx], params[idx + 1], final_act)

    # Lane-dense output slab: 128-aligned, unmasked stores.
    od = out_ref.dtype
    out_ref[:, 0 * p_z:1 * p_z] = mean.astype(od)
    out_ref[:, 1 * p_z:2 * p_z] = logvar.astype(od)
    out_ref[:, 2 * p_z:3 * p_z] = z.astype(od)
    out_ref[:, 3 * p_z:] = recon.astype(od)


# ------------------------------- wrapper --------------------------------------


class VariationalAutoencoderPallas:
    """Mirror of the PyTorch VariationalAutoencoder, fused into one TPU kernel.

    Original (unpadded) f32 weights are kept for reference checks; the kernel uses
    lane-padded, pre-cast (compute_dtype) copies built once at construction.
    """

    def __init__(self, in_size, enc_sizes, dec_sizes, z_dim,
                 encoder_activation=None, decoder_activation=None,
                 final_activation=None, bias=True, key=None,
                 compute_dtype=jnp.bfloat16, tm=1024):
        if key is None:
            key = jax.random.PRNGKey(0)
        self.in_size = in_size
        self.z_dim = z_dim
        self.enc_sizes = [in_size, *enc_sizes]
        self.dec_sizes = [z_dim, *dec_sizes]
        self.encoder_activation = encoder_activation
        self.decoder_activation = decoder_activation
        self.final_activation = final_activation
        self.compute_dtype = compute_dtype
        self.tm = tm

        def init_linear(k, f_in, f_out, with_bias):
            kw, kb = jax.random.split(k)
            bound = 1.0 / (f_in ** 0.5)   # nn.Linear uniform(-1/sqrt(f_in), 1/sqrt(f_in))
            w = jax.random.uniform(kw, (f_in, f_out), jnp.float32, -bound, bound)
            b = (jax.random.uniform(kb, (1, f_out), jnp.float32, -bound, bound)
                 if with_bias else jnp.zeros((1, f_out), jnp.float32))
            return w, b

        # --- original (unpadded, f32) parameters, used by the reference ---
        self.enc_params = []
        for f_in, f_out in zip(self.enc_sizes, self.enc_sizes[1:]):
            key, sub = jax.random.split(key)
            self.enc_params.append(init_linear(sub, f_in, f_out, bias))

        key, sub = jax.random.split(key)
        self.mean_w, self.mean_b = init_linear(sub, enc_sizes[-1], z_dim, True)
        key, sub = jax.random.split(key)
        self.var_w, self.var_b = init_linear(sub, enc_sizes[-1], z_dim, True)

        self.dec_params = []
        for f_in, f_out in zip(self.dec_sizes, self.dec_sizes[1:]):
            key, sub = jax.random.split(key)
            self.dec_params.append(init_linear(sub, f_in, f_out, bias))

        key, sub = jax.random.split(key)
        self.last_w, self.last_b = init_linear(sub, self.dec_sizes[-1], in_size, bias)

        # --- lane-padded, pre-cast parameters for the kernel ---
        self.p_in = _ru(in_size)
        self.p_z = _ru(z_dim)
        p_enc = [_ru(w) for w in self.enc_sizes]
        p_dec = [_ru(w) for w in self.dec_sizes]
        cd = compute_dtype

        def pad_w(w, pi, po):
            return jnp.zeros((pi, po), cd).at[:w.shape[0], :w.shape[1]].set(w.astype(cd))

        def pad_b(b, po):
            return jnp.zeros((1, po), jnp.float32).at[:, :b.shape[1]].set(b)

        flat = []
        for (w, b), pi, po in zip(self.enc_params, p_enc[:-1], p_enc[1:]):
            flat += [pad_w(w, pi, po), pad_b(b, po)]

        # Fused [mean | logvar] head: [p_enc[-1], 2*p_z], each head 128-aligned.
        ph = p_enc[-1]
        head_w = jnp.zeros((ph, 2 * self.p_z), cd)
        head_w = head_w.at[:self.mean_w.shape[0], :z_dim].set(self.mean_w.astype(cd))
        head_w = head_w.at[:self.var_w.shape[0],
                           self.p_z:self.p_z + z_dim].set(self.var_w.astype(cd))
        head_b = jnp.zeros((1, 2 * self.p_z), jnp.float32)
        head_b = head_b.at[:, :z_dim].set(self.mean_b)
        head_b = head_b.at[:, self.p_z:self.p_z + z_dim].set(self.var_b)
        flat += [head_w, head_b]

        for (w, b), pi, po in zip(self.dec_params, p_dec[:-1], p_dec[1:]):
            flat += [pad_w(w, pi, po), pad_b(b, po)]
        flat += [pad_w(self.last_w, p_dec[-1], self.p_in), pad_b(self.last_b, self.p_in)]

        self.flat_params = flat

    # ------------------------------------------------------------------

    def _choose_tm(self, M):
        tm = min(self.tm, M)
        # Ensure >= 2 grid steps when the batch allows (v7x: 2 TensorCores share
        # the "parallel" axis); keep tiles multiples of 16 rows (bf16 packing).
        if M >= 32:
            half = -(-M // 2)
            tm = min(tm, ((half + 15) // 16) * 16)
        if tm != M and tm % 16 != 0:
            tm = M  # fall back to one full-batch tile (block dim == full dim is valid)
        return tm

    def forward(self, x, eps):
        M, K = x.shape
        assert K == self.in_size
        assert eps.shape == (M, self.z_dim)

        p_in, p_z = self.p_in, self.p_z
        in_w = p_in + p_z
        out_w = 3 * p_z + p_in

        # Lane-dense input slab: [x_pad(p_in) | eps_pad(p_z)] in compute dtype
        # (one wide input DMA per tile; no f32 round-trip cast in the kernel).
        xin = jnp.zeros((M, in_w), self.compute_dtype)
        xin = xin.at[:, :K].set(x.astype(self.compute_dtype))
        xin = xin.at[:, p_in:p_in + self.z_dim].set(eps.astype(self.compute_dtype))

        tm = self._choose_tm(M)
        grid = (pl.cdiv(M, tm),)

        n_enc = len(self.enc_params)
        n_dec = len(self.dec_params)

        kernel = functools.partial(
            _vae_kernel,
            n_enc=n_enc, n_dec=n_dec,
            enc_act=self.encoder_activation,
            dec_act=self.decoder_activation,
            final_act=self.final_activation,
            compute_dtype=self.compute_dtype,
            p_in=p_in, p_z=p_z,
        )

        in_specs = [pl.BlockSpec((tm, in_w), lambda i: (i, 0))]
        # All weights/biases: full arrays, VMEM-resident, constant index_map.
        for p in self.flat_params:
            in_specs.append(pl.BlockSpec(p.shape, lambda i: (0, 0)))

        out_shape = jax.ShapeDtypeStruct((M, out_w), x.dtype)
        out_specs = pl.BlockSpec((tm, out_w), lambda i: (i, 0))

        # Advisory cost estimate (padded matmuls + exp / sigmoid / tanh counts).
        weights = self.flat_params[0::2]
        matmul_flops = 2 * M * sum(w.shape[0] * w.shape[1] for w in weights)
        transc = M * p_z  # exp(0.5*logvar)
        enc_out = sum(w.shape[1] for w in weights[:n_enc])
        dec_out = sum(w.shape[1] for w in weights[n_enc + 1:-1])
        if self.encoder_activation in ("sigmoid", "tanh"):
            transc += M * enc_out
        if self.decoder_activation in ("sigmoid", "tanh"):
            transc += M * dec_out
        if self.final_activation in ("sigmoid", "tanh"):
            transc += M * p_in
        bytes_acc = int(xin.size) * jnp.dtype(self.compute_dtype).itemsize \
            + M * out_w * jnp.dtype(x.dtype).itemsize \
            + sum(int(p.size) * jnp.dtype(p.dtype).itemsize for p in self.flat_params)
        cost = pl.CostEstimate(flops=matmul_flops, transcendentals=transc,
                               bytes_accessed=bytes_acc)

        slab = pl.pallas_call(
            kernel,
            out_shape=out_shape,
            grid_spec=pltpu.PrefetchScalarGridSpec(
                num_scalar_prefetch=0,
                grid=grid,
                in_specs=in_specs,
                out_specs=out_specs,
            ),
            compiler_params=pltpu.CompilerParams(
                dimension_semantics=("parallel",),
            ),
            cost_estimate=cost,
        )(xin, *self.flat_params)

        mean = slab[:, 0:self.z_dim]
        logvar = slab[:, p_z:p_z + self.z_dim]
        z = slab[:, 2 * p_z:2 * p_z + self.z_dim]
        recon = slab[:, 3 * p_z:3 * p_z + self.in_size]
        return z, mean, logvar, recon

    def __call__(self, x, key=None, eps=None):
        if eps is None:
            # NOTE: pass a fresh key per call for torch.randn_like semantics;
            # the PRNGKey(0) fallback is deterministic by design (checkable).
            if key is None:
                key = jax.random.PRNGKey(0)
            eps = jax.random.normal(key, (x.shape[0], self.z_dim), jnp.float32)
        return self.forward(x, eps)


# ------------------------------- reference ------------------------------------


def _reference(x, eps, model):
    h = x
    for w, b in model.enc_params:
        h = _apply_act(h @ w + b, model.encoder_activation)
    mean = h @ model.mean_w + model.mean_b
    logvar = h @ model.var_w + model.var_b
    std = jnp.exp(0.5 * logvar)
    z = eps * std + mean
    d = z
    for w, b in model.dec_params:
        d = _apply_act(d @ w + b, model.decoder_activation)
    recon = _apply_act(d @ model.last_w + model.last_b, model.final_activation)
    return z, mean, logvar, recon


# --------------------------------- main ---------------------------------------


if __name__ == "__main__":
    key = jax.random.PRNGKey(0)
    kx, keps, kp = jax.random.split(key, 3)

    # VariationalAutoencoder(in_size=32, enc_sizes=[64,48], dec_sizes=[48,64], z_dim=16)
    in_size, enc_sizes, dec_sizes, z_dim = 32, [64, 48], [48, 64], 16
    batch = 32   # gives a 2-step "parallel" grid (tm=16)

    x = jax.random.normal(kx, (batch, in_size), jnp.float32)
    eps = jax.random.normal(keps, (batch, z_dim), jnp.float32)

    # --- f32 compute path: tight check against the f32 reference ---
    model_f32 = VariationalAutoencoderPallas(
        in_size, enc_sizes, dec_sizes, z_dim,
        encoder_activation="relu", decoder_activation="relu",
        final_activation="sigmoid", bias=True, key=kp,
        compute_dtype=jnp.float32,
    )
    z, mean, logvar, recon = model_f32(x, eps=eps)
    jax.block_until_ready(recon)
    z_r, mean_r, logvar_r, recon_r = _reference(x, eps, model_f32)
    assert z.shape == (batch, z_dim) and mean.shape == (batch, z_dim)
    assert logvar.shape == (batch, z_dim) and recon.shape == (batch, in_size)
    for got, ref, name in ((z, z_r, "z"), (mean, mean_r, "mean"),
                           (logvar, logvar_r, "logvar"), (recon, recon_r, "recon")):
        assert jnp.allclose(got, ref, atol=1e-4, rtol=1e-4), f"mismatch: {name}"

    # --- bf16 MXU path (perf default): relaxed tolerance vs. f32 reference ---
    model_bf16 = VariationalAutoencoderPallas(
        in_size, enc_sizes, dec_sizes, z_dim,
        encoder_activation="relu", decoder_activation="relu",
        final_activation="sigmoid", bias=True, key=kp,
        compute_dtype=jnp.bfloat16,
    )
    outs_bf16 = model_bf16(x, eps=eps)
    jax.block_until_ready(outs_bf16[3])
    refs_bf16 = _reference(x, eps, model_bf16)
    for got, ref, name in zip(outs_bf16, refs_bf16, ("z", "mean", "logvar", "recon")):
        assert jnp.allclose(got, ref, atol=1e-1, rtol=1e-1), f"bf16 mismatch: {name}"

    # --- activation-free default path (encoder/decoder/final act = None) ---
    model2 = VariationalAutoencoderPallas(
        in_size, enc_sizes, dec_sizes, z_dim, bias=True, key=kp,
        compute_dtype=jnp.float32)
    outs2 = model2(x, eps=eps)
    jax.block_until_ready(outs2[3])
    refs2 = _reference(x, eps, model2)
    for got, ref in zip(outs2, refs2):
        assert jnp.allclose(got, ref, atol=1e-4, rtol=1e-4)

    print("KERNEL_OK")
</pallas_src>

<mosaic_0001>
module attributes {stable_mosaic.version = 11 : i64} {
  func.func @_vae_kernel(%arg0: i32, %arg1: memref<16x256xf32, #tpu.memory_space<vmem>>, %arg2: memref<128x128xf32, #tpu.memory_space<vmem>>, %arg3: memref<1x128xf32, #tpu.memory_space<vmem>>, %arg4: memref<128x128xf32, #tpu.memory_space<vmem>>, %arg5: memref<1x128xf32, #tpu.memory_space<vmem>>, %arg6: memref<128x256xf32, #tpu.memory_space<vmem>>, %arg7: memref<1x256xf32, #tpu.memory_space<vmem>>, %arg8: memref<128x128xf32, #tpu.memory_space<vmem>>, %arg9: memref<1x128xf32, #tpu.memory_space<vmem>>, %arg10: memref<128x128xf32, #tpu.memory_space<vmem>>, %arg11: memref<1x128xf32, #tpu.memory_space<vmem>>, %arg12: memref<128x128xf32, #tpu.memory_space<vmem>>, %arg13: memref<1x128xf32, #tpu.memory_space<vmem>>, %arg14: memref<16x512xf32, #tpu.memory_space<vmem>>) attributes {dimension_semantics = [#tpu.dimension_semantics<parallel>], iteration_bounds = array<i64: 2>, scalar_prefetch = 0 : i64, scratch_operands = 0 : i64, tpu.core_type = #tpu.core_type<tc>, window_params = [{transform_indices = @transform_0, window_bounds = array<i64: 16, 256>}, {pipeline_mode = #tpu.pipeline_mode<synchronous>, transform_indices = @transform_1, window_bounds = array<i64: 128, 128>}, {pipeline_mode = #tpu.pipeline_mode<synchronous>, transform_indices = @transform_2, window_bounds = array<i64: 1, 128>}, {pipeline_mode = #tpu.pipeline_mode<synchronous>, transform_indices = @transform_3, window_bounds = array<i64: 128, 128>}, {pipeline_mode = #tpu.pipeline_mode<synchronous>, transform_indices = @transform_4, window_bounds = array<i64: 1, 128>}, {pipeline_mode = #tpu.pipeline_mode<synchronous>, transform_indices = @transform_5, window_bounds = array<i64: 128, 256>}, {pipeline_mode = #tpu.pipeline_mode<synchronous>, transform_indices = @transform_6, window_bounds = array<i64: 1, 256>}, {pipeline_mode = #tpu.pipeline_mode<synchronous>, transform_indices = @transform_7, window_bounds = array<i64: 128, 128>}, {pipeline_mode = #tpu.pipeline_mode<synchronous>, transform_indices = @transform_8, window_bounds = array<i64: 1, 128>}, {pipeline_mode = #tpu.pipeline_mode<synchronous>, transform_indices = @transform_9, window_bounds = array<i64: 128, 128>}, {pipeline_mode = #tpu.pipeline_mode<synchronous>, transform_indices = @transform_10, window_bounds = array<i64: 1, 128>}, {pipeline_mode = #tpu.pipeline_mode<synchronous>, transform_indices = @transform_11, window_bounds = array<i64: 128, 128>}, {pipeline_mode = #tpu.pipeline_mode<synchronous>, transform_indices = @transform_12, window_bounds = array<i64: 1, 128>}, {transform_indices = @transform_13, window_bounds = array<i64: 16, 512>}]} {
    %c0 = arith.constant 0 : index
    %c0_0 = arith.constant 0 : index
    %0 = vector.load %arg1[%c0, %c0_0] : memref<16x256xf32, #tpu.memory_space<vmem>>, vector<16x256xf32>
    %1 = vector.extract_strided_slice %0 {offsets = [0, 0], sizes = [16, 128], strides = [1, 1]} : vector<16x256xf32> to vector<16x128xf32>
    %2 = vector.extract_strided_slice %0 {offsets = [0, 128], sizes = [16, 128], strides = [1, 1]} : vector<16x256xf32> to vector<16x128xf32>
    %c0_1 = arith.constant 0 : index
    %c0_2 = arith.constant 0 : index
    %3 = vector.load %arg2[%c0_1, %c0_2] : memref<128x128xf32, #tpu.memory_space<vmem>>, vector<128x128xf32>
    %cst = arith.constant dense<0.000000e+00> : vector<16x128xf32>
    %4 = tpu.matmul %1, %3, %cst {dimension_numbers = #tpu.dot_dimension_numbers<[1], [0], [0], [1], [0, 0, 1, 1], [], []>} : vector<16x128xf32>, vector<128x128xf32>, vector<16x128xf32> -> vector<16x128xf32>
    %c0_3 = arith.constant 0 : index
    %c0_4 = arith.constant 0 : index
    %5 = vector.load %arg3[%c0_3, %c0_4] : memref<1x128xf32, #tpu.memory_space<vmem>>, vector<1x128xf32>
    %6 = vector.broadcast %5 : vector<1x128xf32> to vector<16x128xf32>
    %7 = arith.addf %4, %6 : vector<16x128xf32>
    %cst_5 = arith.constant 0.000000e+00 : f32
    %8 = vector.broadcast %cst_5 : f32 to vector<16x128xf32>
    %9 = arith.maximumf %7, %8 : vector<16x128xf32>
    %c0_6 = arith.constant 0 : index
    %c0_7 = arith.constant 0 : index
    %10 = vector.load %arg4[%c0_6, %c0_7] : memref<128x128xf32, #tpu.memory_space<vmem>>, vector<128x128xf32>
    %cst_8 = arith.constant dense<0.000000e+00> : vector<16x128xf32>
    %11 = tpu.matmul %9, %10, %cst_8 {dimension_numbers = #tpu.dot_dimension_numbers<[1], [0], [0], [1], [0, 0, 1, 1], [], []>} : vector<16x128xf32>, vector<128x128xf32>, vector<16x128xf32> -> vector<16x128xf32>
    %c0_9 = arith.constant 0 : index
    %c0_10 = arith.constant 0 : index
    %12 = vector.load %arg5[%c0_9, %c0_10] : memref<1x128xf32, #tpu.memory_space<vmem>>, vector<1x128xf32>
    %13 = vector.broadcast %12 : vector<1x128xf32> to vector<16x128xf32>
    %14 = arith.addf %11, %13 : vector<16x128xf32>
    %cst_11 = arith.constant 0.000000e+00 : f32
    %15 = vector.broadcast %cst_11 : f32 to vector<16x128xf32>
    %16 = arith.maximumf %14, %15 : vector<16x128xf32>
    %c0_12 = arith.constant 0 : index
    %c0_13 = arith.constant 0 : index
    %17 = vector.load %arg6[%c0_12, %c0_13] : memref<128x256xf32, #tpu.memory_space<vmem>>, vector<128x256xf32>
    %cst_14 = arith.constant dense<0.000000e+00> : vector<16x256xf32>
    %18 = tpu.matmul %16, %17, %cst_14 {dimension_numbers = #tpu.dot_dimension_numbers<[1], [0], [0], [1], [0, 0, 1, 1], [], []>} : vector<16x128xf32>, vector<128x256xf32>, vector<16x256xf32> -> vector<16x256xf32>
    %c0_15 = arith.constant 0 : index
    %c0_16 = arith.constant 0 : index
    %19 = vector.load %arg7[%c0_15, %c0_16] : memref<1x256xf32, #tpu.memory_space<vmem>>, vector<1x256xf32>
    %20 = vector.broadcast %19 : vector<1x256xf32> to vector<16x256xf32>
    %21 = arith.addf %18, %20 : vector<16x256xf32>
    %22 = vector.extract_strided_slice %21 {offsets = [0, 0], sizes = [16, 128], strides = [1, 1]} : vector<16x256xf32> to vector<16x128xf32>
    %23 = vector.extract_strided_slice %21 {offsets = [0, 128], sizes = [16, 128], strides = [1, 1]} : vector<16x256xf32> to vector<16x128xf32>
    %cst_17 = arith.constant 5.000000e-01 : f32
    %24 = vector.broadcast %cst_17 : f32 to vector<16x128xf32>
    %25 = arith.mulf %24, %23 : vector<16x128xf32>
    %26 = math.exp %25 : vector<16x128xf32>
    %27 = arith.mulf %2, %26 : vector<16x128xf32>
    %28 = arith.addf %27, %22 : vector<16x128xf32>
    %c0_18 = arith.constant 0 : index
    %c0_19 = arith.constant 0 : index
    %29 = vector.load %arg8[%c0_18, %c0_19] : memref<128x128xf32, #tpu.memory_space<vmem>>, vector<128x128xf32>
    %cst_20 = arith.constant dense<0.000000e+00> : vector<16x128xf32>
    %30 = tpu.matmul %28, %29, %cst_20 {dimension_numbers = #tpu.dot_dimension_numbers<[1], [0], [0], [1], [0, 0, 1, 1], [], []>} : vector<16x128xf32>, vector<128x128xf32>, vector<16x128xf32> -> vector<16x128xf32>
    %c0_21 = arith.constant 0 : index
    %c0_22 = arith.constant 0 : index
    %31 = vector.load %arg9[%c0_21, %c0_22] : memref<1x128xf32, #tpu.memory_space<vmem>>, vector<1x128xf32>
    %32 = vector.broadcast %31 : vector<1x128xf32> to vector<16x128xf32>
    %33 = arith.addf %30, %32 : vector<16x128xf32>
    %cst_23 = arith.constant 0.000000e+00 : f32
    %34 = vector.broadcast %cst_23 : f32 to vector<16x128xf32>
    %35 = arith.maximumf %33, %34 : vector<16x128xf32>
    %c0_24 = arith.constant 0 : index
    %c0_25 = arith.constant 0 : index
    %36 = vector.load %arg10[%c0_24, %c0_25] : memref<128x128xf32, #tpu.memory_space<vmem>>, vector<128x128xf32>
    %cst_26 = arith.constant dense<0.000000e+00> : vector<16x128xf32>
    %37 = tpu.matmul %35, %36, %cst_26 {dimension_numbers = #tpu.dot_dimension_numbers<[1], [0], [0], [1], [0, 0, 1, 1], [], []>} : vector<16x128xf32>, vector<128x128xf32>, vector<16x128xf32> -> vector<16x128xf32>
    %c0_27 = arith.constant 0 : index
    %c0_28 = arith.constant 0 : index
    %38 = vector.load %arg11[%c0_27, %c0_28] : memref<1x128xf32, #tpu.memory_space<vmem>>, vector<1x128xf32>
    %39 = vector.broadcast %38 : vector<1x128xf32> to vector<16x128xf32>
    %40 = arith.addf %37, %39 : vector<16x128xf32>
    %cst_29 = arith.constant 0.000000e+00 : f32
    %41 = vector.broadcast %cst_29 : f32 to vector<16x128xf32>
    %42 = arith.maximumf %40, %41 : vector<16x128xf32>
    %c0_30 = arith.constant 0 : index
    %c0_31 = arith.constant 0 : index
    %43 = vector.load %arg12[%c0_30, %c0_31] : memref<128x128xf32, #tpu.memory_space<vmem>>, vector<128x128xf32>
    %cst_32 = arith.constant dense<0.000000e+00> : vector<16x128xf32>
    %44 = tpu.matmul %42, %43, %cst_32 {dimension_numbers = #tpu.dot_dimension_numbers<[1], [0], [0], [1], [0, 0, 1, 1], [], []>} : vector<16x128xf32>, vector<128x128xf32>, vector<16x128xf32> -> vector<16x128xf32>
    %c0_33 = arith.constant 0 : index
    %c0_34 = arith.constant 0 : index
    %45 = vector.load %arg13[%c0_33, %c0_34] : memref<1x128xf32, #tpu.memory_space<vmem>>, vector<1x128xf32>
    %46 = vector.broadcast %45 : vector<1x128xf32> to vector<16x128xf32>
    %47 = arith.addf %44, %46 : vector<16x128xf32>
    %48 = arith.negf %47 : vector<16x128xf32>
    %49 = math.exp %48 : vector<16x128xf32>
    %cst_35 = arith.constant 1.000000e+00 : f32
    %50 = vector.broadcast %cst_35 : f32 to vector<16x128xf32>
    %51 = arith.addf %50, %49 : vector<16x128xf32>
    %52 = arith.divf %50, %51 : vector<16x128xf32>
    %c0_36 = arith.constant 0 : index
    %c0_37 = arith.constant 0 : index
    %53 = vector.load %arg14[%c0_36, %c0_37] : memref<16x512xf32, #tpu.memory_space<vmem>>, vector<16x128xf32>
    tpu.vector_store %arg14[%c0_36, %c0_37], %22 {strides = array<i32>} : memref<16x512xf32, #tpu.memory_space<vmem>>, vector<16x128xf32>,
    %c0_38 = arith.constant 0 : index
    %c128 = arith.constant 128 : index
    %54 = vector.load %arg14[%c0_38, %c128] : memref<16x512xf32, #tpu.memory_space<vmem>>, vector<16x128xf32>
    tpu.vector_store %arg14[%c0_38, %c128], %23 {strides = array<i32>} : memref<16x512xf32, #tpu.memory_space<vmem>>, vector<16x128xf32>,
    %c0_39 = arith.constant 0 : index
    %c256 = arith.constant 256 : index
    %55 = vector.load %arg14[%c0_39, %c256] : memref<16x512xf32, #tpu.memory_space<vmem>>, vector<16x128xf32>
    tpu.vector_store %arg14[%c0_39, %c256], %28 {strides = array<i32>} : memref<16x512xf32, #tpu.memory_space<vmem>>, vector<16x128xf32>,
    %c0_40 = arith.constant 0 : index
    %c384 = arith.constant 384 : index
    %56 = vector.load %arg14[%c0_40, %c384] : memref<16x512xf32, #tpu.memory_space<vmem>>, vector<16x128xf32>
    tpu.vector_store %arg14[%c0_40, %c384], %52 {strides = array<i32>} : memref<16x512xf32, #tpu.memory_space<vmem>>, vector<16x128xf32>,
    return
  }
  func.func @transform_0(%arg0: i32) -> (i32, i32) {
    %c0_i32 = arith.constant 0 : i32
    %c0_i32_0 = arith.constant 0 : i32
    return %arg0, %c0_i32 : i32, i32
  }
  func.func @transform_1(%arg0: i32) -> (i32, i32) {
    %c0_i32 = arith.constant 0 : i32
    %c0_i32_0 = arith.constant 0 : i32
    %c0_i32_1 = arith.constant 0 : i32
    return %c0_i32, %c0_i32_0 : i32, i32
  }
  func.func @transform_2(%arg0: i32) -> (i32, i32) {
    %c0_i32 = arith.constant 0 : i32
    %c0_i32_0 = arith.constant 0 : i32
    %c0_i32_1 = arith.constant 0 : i32
    return %c0_i32, %c0_i32_0 : i32, i32
  }
  func.func @transform_3(%arg0: i32) -> (i32, i32) {
    %c0_i32 = arith.constant 0 : i32
    %c0_i32_0 = arith.constant 0 : i32
    %c0_i32_1 = arith.constant 0 : i32
    return %c0_i32, %c0_i32_0 : i32, i32
  }
  func.func @transform_4(%arg0: i32) -> (i32, i32) {
    %c0_i32 = arith.constant 0 : i32
    %c0_i32_0 = arith.constant 0 : i32
    %c0_i32_1 = arith.constant 0 : i32
    return %c0_i32, %c0_i32_0 : i32, i32
  }
  func.func @transform_5(%arg0: i32) -> (i32, i32) {
    %c0_i32 = arith.constant 0 : i32
    %c0_i32_0 = arith.constant 0 : i32
    %c0_i32_1 = arith.constant 0 : i32
    return %c0_i32, %c0_i32_0 : i32, i32
  }
  func.func @transform_6(%arg0: i32) -> (i32, i32) {
    %c0_i32 = arith.constant 0 : i32
    %c0_i32_0 = arith.constant 0 : i32
    %c0_i32_1 = arith.constant 0 : i32
    return %c0_i32, %c0_i32_0 : i32, i32
  }
  func.func @transform_7(%arg0: i32) -> (i32, i32) {
    %c0_i32 = arith.constant 0 : i32
    %c0_i32_0 = arith.constant 0 : i32
    %c0_i32_1 = arith.constant 0 : i32
    return %c0_i32, %c0_i32_0 : i32, i32
  }
  func.func @transform_8(%arg0: i32) -> (i32, i32) {
    %c0_i32 = arith.constant 0 : i32
    %c0_i32_0 = arith.constant 0 : i32
    %c0_i32_1 = arith.constant 0 : i32
    return %c0_i32, %c0_i32_0 : i32, i32
  }
  func.func @transform_9(%arg0: i32) -> (i32, i32) {
    %c0_i32 = arith.constant 0 : i32
    %c0_i32_0 = arith.constant 0 : i32
    %c0_i32_1 = arith.constant 0 : i32
    return %c0_i32, %c0_i32_0 : i32, i32
  }
  func.func @transform_10(%arg0: i32) -> (i32, i32) {
    %c0_i32 = arith.constant 0 : i32
    %c0_i32_0 = arith.constant 0 : i32
    %c0_i32_1 = arith.constant 0 : i32
    return %c0_i32, %c0_i32_0 : i32, i32
  }
  func.func @transform_11(%arg0: i32) -> (i32, i32) {
    %c0_i32 = arith.constant 0 : i32
    %c0_i32_0 = arith.constant 0 : i32
    %c0_i32_1 = arith.constant 0 : i32
    return %c0_i32, %c0_i32_0 : i32, i32
  }
  func.func @transform_12(%arg0: i32) -> (i32, i32) {
    %c0_i32 = arith.constant 0 : i32
    %c0_i32_0 = arith.constant 0 : i32
    %c0_i32_1 = arith.constant 0 : i32
    return %c0_i32, %c0_i32_0 : i32, i32
  }
  func.func @transform_13(%arg0: i32) -> (i32, i32) {
    %c0_i32 = arith.constant 0 : i32
    %c0_i32_0 = arith.constant 0 : i32
    return %arg0, %c0_i32 : i32, i32
  }
}

</mosaic_0001>

<llo_original>
// kernel: tpu_custom_call.1
$region0: #{tpu_custom_call.1}
  #allocation0 [shape = 'u32[]', space=smem, size = 0x4, offset = 0x4, fixed_abs, tag = 'smem constant byte address 0x4 - core index']
  #allocation1 [shape = 'u32[144,128]{1,0:T(1,128)}', space=vmem, size = 0x12000, scoped, tag = 'internal scratch']
  %s0 = inlined_call_operand.hbm [shape: f32[32,256], index: 0, kind: input, shape index: {}]
  %s1 = inlined_call_operand.hbm [shape: f32[128,128], index: 1, kind: input, shape index: {}]
  %s2 = inlined_call_operand.vmem [shape: f32[1,128], index: 2, kind: input, shape index: {}]
  %s3 = inlined_call_operand.hbm [shape: f32[128,128], index: 3, kind: input, shape index: {}]
  %s4 = inlined_call_operand.vmem [shape: f32[1,128], index: 4, kind: input, shape index: {}]
  %s5 = inlined_call_operand.hbm [shape: f32[128,256], index: 5, kind: input, shape index: {}]
  %s6 = inlined_call_operand.vmem [shape: f32[1,256], index: 6, kind: input, shape index: {}]
  %s7 = inlined_call_operand.hbm [shape: f32[128,128], index: 7, kind: input, shape index: {}]
  %s8 = inlined_call_operand.vmem [shape: f32[1,128], index: 8, kind: input, shape index: {}]
  %s9 = inlined_call_operand.hbm [shape: f32[128,128], index: 9, kind: input, shape index: {}]
  %s10 = inlined_call_operand.vmem [shape: f32[1,128], index: 10, kind: input, shape index: {}]
  %s11 = inlined_call_operand.hbm [shape: f32[128,128], index: 11, kind: input, shape index: {}]
  %s12 = inlined_call_operand.vmem [shape: f32[1,128], index: 12, kind: input, shape index: {}]
  %s13 = inlined_call_operand.hbm [shape: f32[32,512], index: 13, kind: output, shape index: {}]
  %s14 = sld [smem:[#allocation0]]
  $region113: #{tpu_custom_call.1} parent=0
    _
  %s16 = ssub.s32 1, %s14
  %s17 = scalar_select 0, %s16, %s14
  $region1: #{tpu_custom_call.1} parent=0
    #allocation2 [shape = 'u8[32768]{0}', space=vmem, size = 0x8000, scoped, tag = 'input window, operand 0']
    #allocation3 [shape = 's32[2]{0}', space=sflag, size = 0x8, scoped, tag = 'scoped memory for tpu_custom_call.1']
    #allocation4 [shape = 's32[2]{0}', space=sflag, size = 0x8, scoped, tag = 'scoped memory for tpu_custom_call.1']
    #allocation5 [shape = 'u8[65536]{0}', space=vmem, size = 0x10000, scoped, tag = 'input window, operand 1, single buffered']
    #allocation6 [shape = 's32[1]{0}', space=sflag, size = 0x4, scoped, tag = 'scoped memory for tpu_custom_call.1']
    #allocation7 [shape = 'u8[65536]{0}', space=vmem, size = 0x10000, scoped, tag = 'input window, operand 3, single buffered']
    #allocation8 [shape = 'u8[131072]{0}', space=vmem, size = 0x20000, scoped, tag = 'input window, operand 5, single buffered']
    #allocation9 [shape = 's32[1]{0}', space=sflag, size = 0x4, scoped, tag = 'scoped memory for tpu_custom_call.1']
    #allocation10 [shape = 'u8[65536]{0}', space=vmem, size = 0x10000, scoped, tag = 'input window, operand 7, single buffered']
    #allocation11 [shape = 'u8[65536]{0}', space=vmem, size = 0x10000, scoped, tag = 'input window, operand 9, single buffered']
    #allocation12 [shape = 's32[1]{0}', space=sflag, size = 0x4, scoped, tag = 'scoped memory for tpu_custom_call.1']
    #allocation13 [shape = 'u8[65536]{0}', space=vmem, size = 0x10000, scoped, tag = 'input window, operand 11, single buffered']
    #allocation14 [shape = 'u8[65536]{0}', space=vmem, size = 0x10000, scoped, tag = 'output window, operand 0']
    %18 = vsyncpa [#allocation3], 0
    %s19 = scalar_lea.sflag [#allocation3], 1
    %20 = vsyncpa %s19, 0
    %21 = vsyncpa [#allocation6], 0
    %22 = vsyncpa [#allocation9], 0
    %23 = vsyncpa [#allocation12], 0
    %24 = vsyncpa [#allocation4], 0
    %s25 = scalar_lea.sflag [#allocation4], 1
    %26 = vsyncpa %s25, 0
    loop: start=0, step=1, limit=4
    $region2: #{tpu_custom_call.1} parent=1 // loop_pre_header
      _
    $region3: #{tpu_custom_call.1} parent=1 // loop_header
      %s28 = sphi 0, %s32
      %p29 = scmp.ge.s32.totalorder %s28, 4
      %s38 = sphi 0, %s40
      %s41 = sphi 0, %s38
      %s42 = sphi 0, %s41
      %s58 = sphi 0, %s42
      %s62 = sphi 0, %s62
      %s64 = sphi 0, %s62
      %s65 = sphi 0, %s64
      %s79 = sphi 0, %s65
      %s83 = sphi 0, %s83
      %s85 = sphi 0, %s83
      %s86 = sphi 0, %s85
      %s100 = sphi 0, %s86
      %s104 = sphi 0, %s104
      %s106 = sphi 0, %s104
      %s107 = sphi 0, %s106
      %s121 = sphi 0, %s107
      %s125 = sphi 0, %s125
      %s127 = sphi 0, %s125
      %s128 = sphi 0, %s127
      %s142 = sphi 0, %s128
      %s146 = sphi 0, %s146
      %s148 = sphi 0, %s146
      %s149 = sphi 0, %s148
      %s163 = sphi 0, %s149
      %s167 = sphi 0, %s167
      %s169 = sphi 0, %s167
      %s170 = sphi 0, %s169
      %s184 = sphi 0, %s170
      %s188 = sphi 0, %s188
      %s190 = sphi 0, %s188
      %s191 = sphi 0, %s190
      %s205 = sphi 0, %s191
      %s209 = sphi 0, %s209
      %s211 = sphi 0, %s209
      %s212 = sphi 0, %s211
      %s226 = sphi 0, %s212
      %s230 = sphi 0, %s230
      %s232 = sphi 0, %s230
      %s233 = sphi 0, %s232
      %s247 = sphi 0, %s233
      %s251 = sphi 0, %s251
      %s253 = sphi 0, %s251
      %s254 = sphi 0, %s253
      %s268 = sphi 0, %s254
      %s272 = sphi 0, %s272
      %s274 = sphi 0, %s272
      %s275 = sphi 0, %s274
      %s289 = sphi 0, %s275
      %s293 = sphi 0, %s293
      %s295 = sphi 0, %s293
      %s296 = sphi 0, %s295
      %s310 = sphi 0, %s296
      %s316 = sphi 0, %s318
      %s319 = sphi 0, %s316
      %s320 = sphi 0, %s319
      %s336 = sphi 0, %s320
    $region4: #{tpu_custom_call.1} parent=1 // loop_header_branch
      %31 = sbr.rel (%p29) target = $region8
    $region5: #{tpu_custom_call.1} parent=1 // loop_body
      %s33 = ssub.s32 %s28, 1
      %s34 = ssub.s32 %s28, 2
      %s35 = sadd.s32 %s28, 1
      %s36 = ssub.s32 %s28, %s35
      %p37 = scmp.eq.s32.totalorder %s36, 0
      %s39 = sadd.s32 %s38, 1
      %s40 = scalar_select %p37, %s38, %s39
      %p43 = pneg %p37
      %p44 = scmp.eq.s32.totalorder %s28, 1
      %p45 = por %p43, %p44
      %p46 = scmp.ne.s32.totalorder %s38, %s41
      %p47 = scmp.eq.s32.totalorder %s28, 0
      %p48 = por %p46, %p47
      %p49 = scmp.ne.s32.totalorder %s38, %s41
      %p50 = scmp.eq.s32.totalorder %s33, 1
      %p51 = por %p49, %p50
      %p52 = scmp.ne.s32.totalorder %s41, %s42
      %p53 = scmp.eq.s32.totalorder %s33, 0
      %p54 = por %p52, %p53
      %p55 = scmp.ne.s32.totalorder %s41, %s42
      %p56 = scmp.eq.s32.totalorder %s34, 1
      %p57 = por %p55, %p56
      %p59 = scmp.ne.s32.totalorder %s42, %s58
      %p60 = scmp.eq.s32.totalorder %s34, 0
      %p61 = por %p59, %p60
      %s63 = sadd.s32 %s62, 1
      %p66 = scmp.eq.s32.totalorder %s28, 1
      %p67 = scmp.ne.s32.totalorder %s62, %s64
      %p68 = scmp.eq.s32.totalorder %s28, 0
      %p69 = por %p67, %p68
      %p70 = scmp.ne.s32.totalorder %s62, %s64
      %p71 = scmp.eq.s32.totalorder %s33, 1
      %p72 = por %p70, %p71
      %p73 = scmp.ne.s32.totalorder %s64, %s65
      %p74 = scmp.eq.s32.totalorder %s33, 0
      %p75 = por %p73, %p74
      %p76 = scmp.ne.s32.totalorder %s64, %s65
      %p77 = scmp.eq.s32.totalorder %s34, 1
      %p78 = por %p76, %p77
      %p80 = scmp.ne.s32.totalorder %s65, %s79
      %p81 = scmp.eq.s32.totalorder %s34, 0
      %p82 = por %p80, %p81
      %s84 = sadd.s32 %s83, 1
      %p87 = scmp.eq.s32.totalorder %s28, 1
      %p88 = scmp.ne.s32.totalorder %s83, %s85
      %p89 = scmp.eq.s32.totalorder %s28, 0
      %p90 = por %p88, %p89
      %p91 = scmp.ne.s32.totalorder %s83, %s85
      %p92 = scmp.eq.s32.totalorder %s33, 1
      %p93 = por %p91, %p92
      %p94 = scmp.ne.s32.totalorder %s85, %s86
      %p95 = scmp.eq.s32.totalorder %s33, 0
      %p96 = por %p94, %p95
      %p97 = scmp.ne.s32.totalorder %s85, %s86
      %p98 = scmp.eq.s32.totalorder %s34, 1
      %p99 = por %p97, %p98
      %p101 = scmp.ne.s32.totalorder %s86, %s100
      %p102 = scmp.eq.s32.totalorder %s34, 0
      %p103 = por %p101, %p102
      %s105 = sadd.s32 %s104, 1
      %p108 = scmp.eq.s32.totalorder %s28, 1
      %p109 = scmp.ne.s32.totalorder %s104, %s106
      %p110 = scmp.eq.s32.totalorder %s28, 0
      %p111 = por %p109, %p110
      %p112 = scmp.ne.s32.totalorder %s104, %s106
      %p113 = scmp.eq.s32.totalorder %s33, 1
      %p114 = por %p112, %p113
      %p115 = scmp.ne.s32.totalorder %s106, %s107
      %p116 = scmp.eq.s32.totalorder %s33, 0
      %p117 = por %p115, %p116
      %p118 = scmp.ne.s32.totalorder %s106, %s107
      %p119 = scmp.eq.s32.totalorder %s34, 1
      %p120 = por %p118, %p119
      %p122 = scmp.ne.s32.totalorder %s107, %s121
      %p123 = scmp.eq.s32.totalorder %s34, 0
      %p124 = por %p122, %p123
      %s126 = sadd.s32 %s125, 1
      %p129 = scmp.eq.s32.totalorder %s28, 1
      %p130 = scmp.ne.s32.totalorder %s125, %s127
      %p131 = scmp.eq.s32.totalorder %s28, 0
      %p132 = por %p130, %p131
      %p133 = scmp.ne.s32.totalorder %s125, %s127
      %p134 = scmp.eq.s32.totalorder %s33, 1
      %p135 = por %p133, %p134
      %p136 = scmp.ne.s32.totalorder %s127, %s128
      %p137 = scmp.eq.s32.totalorder %s33, 0
      %p138 = por %p136, %p137
      %p139 = scmp.ne.s32.totalorder %s127, %s128
      %p140 = scmp.eq.s32.totalorder %s34, 1
      %p141 = por %p139, %p140
      %p143 = scmp.ne.s32.totalorder %s128, %s142
      %p144 = scmp.eq.s32.totalorder %s34, 0
      %p145 = por %p143, %p144
      %s147 = sadd.s32 %s146, 1
      %p150 = scmp.eq.s32.totalorder %s28, 1
      %p151 = scmp.ne.s32.totalorder %s146, %s148
      %p152 = scmp.eq.s32.totalorder %s28, 0
      %p153 = por %p151, %p152
      %p154 = scmp.ne.s32.totalorder %s146, %s148
      %p155 = scmp.eq.s32.totalorder %s33, 1
      %p156 = por %p154, %p155
      %p157 = scmp.ne.s32.totalorder %s148, %s149
      %p158 = scmp.eq.s32.totalorder %s33, 0
      %p159 = por %p157, %p158
      %p160 = scmp.ne.s32.totalorder %s148, %s149
      %p161 = scmp.eq.s32.totalorder %s34, 1
      %p162 = por %p160, %p161
      %p164 = scmp.ne.s32.totalorder %s149, %s163
      %p165 = scmp.eq.s32.totalorder %s34, 0
      %p166 = por %p164, %p165
      %s168 = sadd.s32 %s167, 1
      %p171 = scmp.eq.s32.totalorder %s28, 1
      %p172 = scmp.ne.s32.totalorder %s167, %s169
      %p173 = scmp.eq.s32.totalorder %s28, 0
      %p174 = por %p172, %p173
      %p175 = scmp.ne.s32.totalorder %s167, %s169
      %p176 = scmp.eq.s32.totalorder %s33, 1
      %p177 = por %p175, %p176
      %p178 = scmp.ne.s32.totalorder %s169, %s170
      %p179 = scmp.eq.s32.totalorder %s33, 0
      %p180 = por %p178, %p179
      %p181 = scmp.ne.s32.totalorder %s169, %s170
      %p182 = scmp.eq.s32.totalorder %s34, 1
      %p183 = por %p181, %p182
      %p185 = scmp.ne.s32.totalorder %s170, %s184
      %p186 = scmp.eq.s32.totalorder %s34, 0
      %p187 = por %p185, %p186
      %s189 = sadd.s32 %s188, 1
      %p192 = scmp.eq.s32.totalorder %s28, 1
      %p193 = scmp.ne.s32.totalorder %s188, %s190
      %p194 = scmp.eq.s32.totalorder %s28, 0
      %p195 = por %p193, %p194
      %p196 = scmp.ne.s32.totalorder %s188, %s190
      %p197 = scmp.eq.s32.totalorder %s33, 1
      %p198 = por %p196, %p197
      %p199 = scmp.ne.s32.totalorder %s190, %s191
      %p200 = scmp.eq.s32.totalorder %s33, 0
      %p201 = por %p199, %p200
      %p202 = scmp.ne.s32.totalorder %s190, %s191
      %p203 = scmp.eq.s32.totalorder %s34, 1
      %p204 = por %p202, %p203
      %p206 = scmp.ne.s32.totalorder %s191, %s205
      %p207 = scmp.eq.s32.totalorder %s34, 0
      %p208 = por %p206, %p207
      %s210 = sadd.s32 %s209, 1
      %p213 = scmp.eq.s32.totalorder %s28, 1
      %p214 = scmp.ne.s32.totalorder %s209, %s211
      %p215 = scmp.eq.s32.totalorder %s28, 0
      %p216 = por %p214, %p215
      %p217 = scmp.ne.s32.totalorder %s209, %s211
      %p218 = scmp.eq.s32.totalorder %s33, 1
      %p219 = por %p217, %p218
      %p220 = scmp.ne.s32.totalorder %s211, %s212
      %p221 = scmp.eq.s32.totalorder %s33, 0
      %p222 = por %p220, %p221
      %p223 = scmp.ne.s32.totalorder %s211, %s212
      %p224 = scmp.eq.s32.totalorder %s34, 1
      %p225 = por %p223, %p224
      %p227 = scmp.ne.s32.totalorder %s212, %s226
      %p228 = scmp.eq.s32.totalorder %s34, 0
      %p229 = por %p227, %p228
      %s231 = sadd.s32 %s230, 1
      %p234 = scmp.eq.s32.totalorder %s28, 1
      %p235 = scmp.ne.s32.totalorder %s230, %s232
      %p236 = scmp.eq.s32.totalorder %s28, 0
      %p237 = por %p235, %p236
      %p238 = scmp.ne.s32.totalorder %s230, %s232
      %p239 = scmp.eq.s32.totalorder %s33, 1
      %p240 = por %p238, %p239
      %p241 = scmp.ne.s32.totalorder %s232, %s233
      %p242 = scmp.eq.s32.totalorder %s33, 0
      %p243 = por %p241, %p242
      %p244 = scmp.ne.s32.totalorder %s232, %s233
      %p245 = scmp.eq.s32.totalorder %s34, 1
      %p246 = por %p244, %p245
      %p248 = scmp.ne.s32.totalorder %s233, %s247
      %p249 = scmp.eq.s32.totalorder %s34, 0
      %p250 = por %p248, %p249
      %s252 = sadd.s32 %s251, 1
      %p255 = scmp.eq.s32.totalorder %s28, 1
      %p256 = scmp.ne.s32.totalorder %s251, %s253
      %p257 = scmp.eq.s32.totalorder %s28, 0
      %p258 = por %p256, %p257
      %p259 = scmp.ne.s32.totalorder %s251, %s253
      %p260 = scmp.eq.s32.totalorder %s33, 1
      %p261 = por %p259, %p260
      %p262 = scmp.ne.s32.totalorder %s253, %s254
      %p263 = scmp.eq.s32.totalorder %s33, 0
      %p264 = por %p262, %p263
      %p265 = scmp.ne.s32.totalorder %s253, %s254
      %p266 = scmp.eq.s32.totalorder %s34, 1
      %p267 = por %p265, %p266
      %p269 = scmp.ne.s32.totalorder %s254, %s268
      %p270 = scmp.eq.s32.totalorder %s34, 0
      %p271 = por %p269, %p270
      %s273 = sadd.s32 %s272, 1
      %p276 = scmp.eq.s32.totalorder %s28, 1
      %p277 = scmp.ne.s32.totalorder %s272, %s274
      %p278 = scmp.eq.s32.totalorder %s28, 0
      %p279 = por %p277, %p278
      %p280 = scmp.ne.s32.totalorder %s272, %s274
      %p281 = scmp.eq.s32.totalorder %s33, 1
      %p282 = por %p280, %p281
      %p283 = scmp.ne.s32.totalorder %s274, %s275
      %p284 = scmp.eq.s32.totalorder %s33, 0
      %p285 = por %p283, %p284
      %p286 = scmp.ne.s32.totalorder %s274, %s275
      %p287 = scmp.eq.s32.totalorder %s34, 1
      %p288 = por %p286, %p287
      %p290 = scmp.ne.s32.totalorder %s275, %s289
      %p291 = scmp.eq.s32.totalorder %s34, 0
      %p292 = por %p290, %p291
      %s294 = sadd.s32 %s293, 1
      %p297 = scmp.eq.s32.totalorder %s28, 1
      %p298 = scmp.ne.s32.totalorder %s293, %s295
      %p299 = scmp.eq.s32.totalorder %s28, 0
      %p300 = por %p298, %p299
      %p301 = scmp.ne.s32.totalorder %s293, %s295
      %p302 = scmp.eq.s32.totalorder %s33, 1
      %p303 = por %p301, %p302
      %p304 = scmp.ne.s32.totalorder %s295, %s296
      %p305 = scmp.eq.s32.totalorder %s33, 0
      %p306 = por %p304, %p305
      %p307 = scmp.ne.s32.totalorder %s295, %s296
      %p308 = scmp.eq.s32.totalorder %s34, 1
      %p309 = por %p307, %p308
      %p311 = scmp.ne.s32.totalorder %s296, %s310
      %p312 = scmp.eq.s32.totalorder %s34, 0
      %p313 = por %p311, %p312
      %s314 = ssub.s32 %s28, %s35
      %p315 = scmp.eq.s32.totalorder %s314, 0
      %s317 = sadd.s32 %s316, 1
      %s318 = scalar_select %p315, %s316, %s317
      %p321 = pneg %p315
      %p322 = scmp.eq.s32.totalorder %s28, 1
      %p323 = por %p321, %p322
      %p324 = scmp.ne.s32.totalorder %s316, %s319
      %p325 = scmp.eq.s32.totalorder %s28, 0
      %p326 = por %p324, %p325
      %p327 = scmp.ne.s32.totalorder %s316, %s319
      %p328 = scmp.eq.s32.totalorder %s33, 1
      %p329 = por %p327, %p328
      %p330 = scmp.ne.s32.totalorder %s319, %s320
      %p331 = scmp.eq.s32.totalorder %s33, 0
      %p332 = por %p330, %p331
      %p333 = scmp.ne.s32.totalorder %s319, %s320
      %p334 = scmp.eq.s32.totalorder %s34, 1
      %p335 = por %p333, %p334
      %p337 = scmp.ne.s32.totalorder %s320, %s336
      %p338 = scmp.eq.s32.totalorder %s34, 0
      %p339 = por %p337, %p338
      %p340 = scmp.le.s32.totalorder 1, %s28
      %p341 = scmp.lt.s32.totalorder %s28, 3
      %p342 = pnand %p340, %p341
      %p343 = pneg %p342
      // Predicated region
      $region9: #{tpu_custom_call.1} parent=5 // pred_check
        _
      $region10: #{tpu_custom_call.1} parent=5 // pred_check_branch
        %345 = sbr.rel (%p342) target = $region12
      $region11: #{tpu_custom_call.1} parent=5 // pred_region
        %s346 = ssub.s32 %s28, 1
        // Predicated region
        $region13: #{tpu_custom_call.1} parent=11 // pred_check
          %p347 = pneg %p75
        $region14: #{tpu_custom_call.1} parent=11 // pred_check_branch
          %349 = sbr.rel (%p347) target = $region16
        $region15: #{tpu_custom_call.1} parent=11 // pred_region
          %s351 = ssub.s32 2048, 2048
          %352 = vsyncadd [#allocation6], %s351
          %s353 = sshll.u32 [#allocation5], 4
          %s354 = int_to_ptr.vmem [resolvable:$true] %s353
          %359 = dma.hbm_to_vmem [thread:$0]  %s1, 2048, %s354, [#allocation6], 128, 128, 8
        $region16: #{tpu_custom_call.1} parent=11 // pred_fallthru
          _
        // Predicated region
        $region17: #{tpu_custom_call.1} parent=11 // pred_check
          %p360 = pneg %p96
        $region18: #{tpu_custom_call.1} parent=11 // pred_check_branch
          %362 = sbr.rel (%p360) target = $region20
        $region19: #{tpu_custom_call.1} parent=11 // pred_region
          _
        $region20: #{tpu_custom_call.1} parent=11 // pred_fallthru
          _
        // Predicated region
        $region21: #{tpu_custom_call.1} parent=11 // pred_check
          %p363 = pneg %p117
        $region22: #{tpu_custom_call.1} parent=11 // pred_check_branch
          %365 = sbr.rel (%p363) target = $region24
        $region23: #{tpu_custom_call.1} parent=11 // pred_region
          %s367 = ssub.s32 2048, 2048
          %368 = vsyncadd [#allocation6], %s367
          %s369 = sshll.u32 [#allocation7], 4
          %s370 = int_to_ptr.vmem [resolvable:$true] %s369
          %375 = dma.hbm_to_vmem [thread:$0]  %s3, 2048, %s370, [#allocation6], 128, 128, 8
        $region24: #{tpu_custom_call.1} parent=11 // pred_fallthru
          _
        // Predicated region
        $region25: #{tpu_custom_call.1} parent=11 // pred_check
          %p376 = pneg %p138
        $region26: #{tpu_custom_call.1} parent=11 // pred_check_branch
          %378 = sbr.rel (%p376) target = $region28
        $region27: #{tpu_custom_call.1} parent=11 // pred_region
          _
        $region28: #{tpu_custom_call.1} parent=11 // pred_fallthru
          _
        // Predicated region
        $region29: #{tpu_custom_call.1} parent=11 // pred_check
          %p379 = pneg %p159
        $region30: #{tpu_custom_call.1} parent=11 // pred_check_branch
          %381 = sbr.rel (%p379) target = $region32
        $region31: #{tpu_custom_call.1} parent=11 // pred_region
          %s383 = ssub.s32 4096, 4096
          %384 = vsyncadd [#allocation9], %s383
          %s385 = sshll.u32 [#allocation8], 4
          %s386 = int_to_ptr.vmem [resolvable:$true] %s385
          %391 = dma.hbm_to_vmem [thread:$0]  %s5, 4096, %s386, [#allocation9], 256, 256, 16
        $region32: #{tpu_custom_call.1} parent=11 // pred_fallthru
          _
        // Predicated region
        $region33: #{tpu_custom_call.1} parent=11 // pred_check
          %p392 = pneg %p180
        $region34: #{tpu_custom_call.1} parent=11 // pred_check_branch
          %394 = sbr.rel (%p392) target = $region36
        $region35: #{tpu_custom_call.1} parent=11 // pred_region
          _
        $region36: #{tpu_custom_call.1} parent=11 // pred_fallthru
          _
        // Predicated region
        $region37: #{tpu_custom_call.1} parent=11 // pred_check
          %p395 = pneg %p201
        $region38: #{tpu_custom_call.1} parent=11 // pred_check_branch
          %397 = sbr.rel (%p395) target = $region40
        $region39: #{tpu_custom_call.1} parent=11 // pred_region
          %s399 = ssub.s32 2048, 2048
          %400 = vsyncadd [#allocation9], %s399
          %s401 = sshll.u32 [#allocation10], 4
          %s402 = int_to_ptr.vmem [resolvable:$true] %s401
          %407 = dma.hbm_to_vmem [thread:$0]  %s7, 2048, %s402, [#allocation9], 128, 128, 8
        $region40: #{tpu_custom_call.1} parent=11 // pred_fallthru
          _
        // Predicated region
        $region41: #{tpu_custom_call.1} parent=11 // pred_check
          %p408 = pneg %p222
        $region42: #{tpu_custom_call.1} parent=11 // pred_check_branch
          %410 = sbr.rel (%p408) target = $region44
        $region43: #{tpu_custom_call.1} parent=11 // pred_region
          _
        $region44: #{tpu_custom_call.1} parent=11 // pred_fallthru
          _
        // Predicated region
        $region45: #{tpu_custom_call.1} parent=11 // pred_check
          %p411 = pneg %p243
        $region46: #{tpu_custom_call.1} parent=11 // pred_check_branch
          %413 = sbr.rel (%p411) target = $region48
        $region47: #{tpu_custom_call.1} parent=11 // pred_region
          %s415 = ssub.s32 2048, 2048
          %416 = vsyncadd [#allocation12], %s415
          %s417 = sshll.u32 [#allocation11], 4
          %s418 = int_to_ptr.vmem [resolvable:$true] %s417
          %423 = dma.hbm_to_vmem [thread:$0]  %s9, 2048, %s418, [#allocation12], 128, 128, 8
        $region48: #{tpu_custom_call.1} parent=11 // pred_fallthru
          _
        // Predicated region
        $region49: #{tpu_custom_call.1} parent=11 // pred_check
          %p424 = pneg %p264
        $region50: #{tpu_custom_call.1} parent=11 // pred_check_branch
          %426 = sbr.rel (%p424) target = $region52
        $region51: #{tpu_custom_call.1} parent=11 // pred_region
          _
        $region52: #{tpu_custom_call.1} parent=11 // pred_fallthru
          _
        // Predicated region
        $region53: #{tpu_custom_call.1} parent=11 // pred_check
          %p427 = pneg %p285
        $region54: #{tpu_custom_call.1} parent=11 // pred_check_branch
          %429 = sbr.rel (%p427) target = $region56
        $region55: #{tpu_custom_call.1} parent=11 // pred_region
          %s431 = ssub.s32 2048, 2048
          %432 = vsyncadd [#allocation12], %s431
          %s433 = sshll.u32 [#allocation13], 4
          %s434 = int_to_ptr.vmem [resolvable:$true] %s433
          %439 = dma.hbm_to_vmem [thread:$0]  %s11, 2048, %s434, [#allocation12], 128, 128, 8
        $region56: #{tpu_custom_call.1} parent=11 // pred_fallthru
          _
        // Predicated region
        $region57: #{tpu_custom_call.1} parent=11 // pred_check
          %p440 = pneg %p306
        $region58: #{tpu_custom_call.1} parent=11 // pred_check_branch
          %442 = sbr.rel (%p440) target = $region60
        $region59: #{tpu_custom_call.1} parent=11 // pred_region
          _
        $region60: #{tpu_custom_call.1} parent=11 // pred_fallthru
          _
      $region12: #{tpu_custom_call.1} parent=5 // pred_fallthru
        _
      %p443 = scmp.lt.s32.totalorder %s28, 2
      // Predicated region
      $region61: #{tpu_custom_call.1} parent=5 // pred_check
        %p444 = pneg %p443
      $region62: #{tpu_custom_call.1} parent=5 // pred_check_branch
        %446 = sbr.rel (%p444) target = $region64
      $region63: #{tpu_custom_call.1} parent=5 // pred_region
        // Predicated region
        $region65: #{tpu_custom_call.1} parent=63 // pred_check
          %p447 = pneg %p48
        $region66: #{tpu_custom_call.1} parent=63 // pred_check_branch
          %449 = sbr.rel (%p447) target = $region68
        $region67: #{tpu_custom_call.1} parent=63 // pred_region
          %s450 = sand.u32 %s38, 1
          %s451 = scalar_lea.sflag [#allocation3], %s450
          %s452 = sand.u32 %s38, 1
          %s453 = smul.addr %s452, 32
          %s454 = scalar_lea.vmem [#allocation2], %s453
          %s455 = smul.u32 2, %s28
          %s457 = ssub.s32 512, 512
          %458 = vsyncadd %s451, %s457
          %s459 = smul.addr %s455, 2
          %s460 = smul.addr %s459, 128
          %s461 = scalar_lea.hbm %s0, %s460
          %s462 = sshll.u32 %s454, 4
          %s463 = int_to_ptr.vmem [resolvable:$true] %s462
          %468 = dma.hbm_to_vmem [thread:$0]  %s461, 512, %s463, %s451, 256, 256, 16
        $region68: #{tpu_custom_call.1} parent=63 // pred_fallthru
          _
      $region64: #{tpu_custom_call.1} parent=5 // pred_fallthru
        _
      %p469 = scmp.le.s32.totalorder 1, %s28
      %p470 = scmp.lt.s32.totalorder %s28, 3
      %p471 = pnand %p469, %p470
      %p472 = pneg %p471
      // Predicated region
      $region69: #{tpu_custom_call.1} parent=5 // pred_check
        _
      $region70: #{tpu_custom_call.1} parent=5 // pred_check_branch
        %474 = sbr.rel (%p471) target = $region72
      $region71: #{tpu_custom_call.1} parent=5 // pred_region
        %s475 = ssub.s32 %s28, 1
        %s476 = sand.u32 %s41, 1
        %s477 = scalar_lea.sflag [#allocation3], %s476
        %s478 = sand.u32 %s41, 1
        %s479 = smul.addr %s478, 32
        %s480 = scalar_lea.vmem [#allocation2], %s479
        // Predicated region
        $region73: #{tpu_custom_call.1} parent=71 // pred_check
          %p481 = pneg %p54
        $region74: #{tpu_custom_call.1} parent=71 // pred_check_branch
          %483 = sbr.rel (%p481) target = $region76
        $region75: #{tpu_custom_call.1} parent=71 // pred_region
          %484 = dma.done %s477, 512
        $region76: #{tpu_custom_call.1} parent=71 // pred_fallthru
          _
        // Predicated region
        $region77: #{tpu_custom_call.1} parent=71 // pred_check
          %p485 = pneg %p75
        $region78: #{tpu_custom_call.1} parent=71 // pred_check_branch
          %487 = sbr.rel (%p485) target = $region80
        $region79: #{tpu_custom_call.1} parent=71 // pred_region
          %488 = dma.done [#allocation6], 2048
        $region80: #{tpu_custom_call.1} parent=71 // pred_fallthru
          _
        // Predicated region
        $region81: #{tpu_custom_call.1} parent=71 // pred_check
          %p489 = pneg %p117
        $region82: #{tpu_custom_call.1} parent=71 // pred_check_branch
          %491 = sbr.rel (%p489) target = $region84
        $region83: #{tpu_custom_call.1} parent=71 // pred_region
          %492 = dma.done [#allocation6], 2048
        $region84: #{tpu_custom_call.1} parent=71 // pred_fallthru
          _
        // Predicated region
        $region85: #{tpu_custom_call.1} parent=71 // pred_check
          %p493 = pneg %p159
        $region86: #{tpu_custom_call.1} parent=71 // pred_check_branch
          %495 = sbr.rel (%p493) target = $region88
        $region87: #{tpu_custom_call.1} parent=71 // pred_region
          %496 = dma.done [#allocation9], 4096
        $region88: #{tpu_custom_call.1} parent=71 // pred_fallthru
          _
        // Predicated region
        $region89: #{tpu_custom_call.1} parent=71 // pred_check
          %p497 = pneg %p201
        $region90: #{tpu_custom_call.1} parent=71 // pred_check_branch
          %499 = sbr.rel (%p497) target = $region92
        $region91: #{tpu_custom_call.1} parent=71 // pred_region
          %500 = dma.done [#allocation9], 2048
        $region92: #{tpu_custom_call.1} parent=71 // pred_fallthru
          _
        // Predicated region
        $region93: #{tpu_custom_call.1} parent=71 // pred_check
          %p501 = pneg %p243
        $region94: #{tpu_custom_call.1} parent=71 // pred_check_branch
          %503 = sbr.rel (%p501) target = $region96
        $region95: #{tpu_custom_call.1} parent=71 // pred_region
          %504 = dma.done [#allocation12], 2048
        $region96: #{tpu_custom_call.1} parent=71 // pred_fallthru
          _
        // Predicated region
        $region97: #{tpu_custom_call.1} parent=71 // pred_check
          %p505 = pneg %p285
        $region98: #{tpu_custom_call.1} parent=71 // pred_check_branch
          %507 = sbr.rel (%p505) target = $region100
        $region99: #{tpu_custom_call.1} parent=71 // pred_region
          %508 = dma.done [#allocation12], 2048
        $region100: #{tpu_custom_call.1} parent=71 // pred_fallthru
          _
        %s509 = sand.u32 %s41, 1
        %s510 = scalar_lea.sflag [#allocation3], %s509
        %s511 = sand.u32 %s41, 1
        %s512 = smul.addr %s511, 32
        %s513 = scalar_lea.vmem [#allocation2], %s512
        %p514 = pneg %p54
        %p515 = pneg %p51
        %p516 = pneg %p75
        %p517 = pneg %p72
        %p518 = pneg %p96
        %p519 = pneg %p93
        %p520 = pneg %p117
        %p521 = pneg %p114
        %p522 = pneg %p138
        %p523 = pneg %p135
        %p524 = pneg %p159
        %p525 = pneg %p156
        %p526 = pneg %p180
        %p527 = pneg %p177
        %p528 = pneg %p201
        %p529 = pneg %p198
        %p530 = pneg %p222
        %p531 = pneg %p219
        %p532 = pneg %p243
        %p533 = pneg %p240
        %p534 = pneg %p264
        %p535 = pneg %p261
        %p536 = pneg %p285
        %p537 = pneg %p282
        %p538 = pneg %p306
        %p539 = pneg %p303
        %p540 = pneg %p332
        %p541 = pneg %p329
        %s542 = sand.u32 %s319, 1
        %s543 = scalar_lea.sflag [#allocation4], %s542
        %s544 = sand.u32 %s319, 1
        %s545 = smul.addr %s544, 64
        %s546 = scalar_lea.vmem [#allocation14], %s545
        %s547 = smul.u32 2, %s33
        %s548 = smul.u32 2, %s33
        %v549 = vld [vmem:[%s480] sm:$0xff]
        %v550 = vld [vmem:[%s480 + $0x8] sm:$0xff]
        %v551 = vld [vmem:[%s480 + $0x10] sm:$0xff]
        %v552 = vld [vmem:[%s480 + $0x18] sm:$0xff]
        %v553 = vld [vmem:[#allocation5] sm:$0xff]
        %v554 = vld [vmem:[#allocation5 + $0x8] sm:$0xff]
        %v555 = vld [vmem:[#allocation5 + $0x10] sm:$0xff]
        %v556 = vld [vmem:[#allocation5 + $0x18] sm:$0xff]
        %v557 = vld [vmem:[#allocation5 + $0x20] sm:$0xff]
        %v558 = vld [vmem:[#allocation5 + $0x28] sm:$0xff]
        %v559 = vld [vmem:[#allocation5 + $0x30] sm:$0xff]
        %v560 = vld [vmem:[#allocation5 + $0x38] sm:$0xff]
        %v561 = vld [vmem:[#allocation5 + $0x40] sm:$0xff]
        %v562 = vld [vmem:[#allocation5 + $0x48] sm:$0xff]
        %v563 = vld [vmem:[#allocation5 + $0x50] sm:$0xff]
        %v564 = vld [vmem:[#allocation5 + $0x58] sm:$0xff]
        %v565 = vld [vmem:[#allocation5 + $0x60] sm:$0xff]
        %v566 = vld [vmem:[#allocation5 + $0x68] sm:$0xff]
        %v567 = vld [vmem:[#allocation5 + $0x70] sm:$0xff]
        %v568 = vld [vmem:[#allocation5 + $0x78] sm:$0xff]
        %v569 = vld [vmem:[%s2] sm:$0x1]
        %v571 = vlaneseq
        %v572 = vshrl.u32 %v571, 7
        %v573 = vsub.s32 0, %v572
        %v574 = vrot.slane %v569, %v573
        %576 = vmatprep.subr.mxu0 0.0
        %577 = vmatpush1.msra.mxu0 %v568
        %578 = vmatprep.subr.mxu0 0.0
        %579 = vmatpush1.msra.mxu0 %v567
        %580 = vmatprep.subr.mxu0 0.0
        %581 = vmatpush1.msra.mxu0 %v566
        %582 = vmatprep.subr.mxu0 0.0
        %583 = vmatpush1.msra.mxu0 %v565
        %584 = vmatprep.subr.mxu0 0.0
        %585 = vmatpush1.msra.mxu0 %v564
        %586 = vmatprep.subr.mxu0 0.0
        %587 = vmatpush1.msra.mxu0 %v563
        %588 = vmatprep.subr.mxu0 0.0
        %589 = vmatpush1.msra.mxu0 %v562
        %590 = vmatprep.subr.mxu0 0.0
        %591 = vmatpush1.msra.mxu0 %v561
        %592 = vmatprep.subr.mxu0 0.0
        %593 = vmatpush1.msra.mxu0 %v560
        %594 = vmatprep.subr.mxu0 0.0
        %595 = vmatpush1.msra.mxu0 %v559
        %596 = vmatprep.subr.mxu0 0.0
        %597 = vmatpush1.msra.mxu0 %v558
        %598 = vmatprep.subr.mxu0 0.0
        %599 = vmatpush1.msra.mxu0 %v557
        %600 = vmatprep.subr.mxu0 0.0
        %601 = vmatpush1.msra.mxu0 %v556
        %602 = vmatprep.subr.mxu0 0.0
        %603 = vmatpush1.msra.mxu0 %v555
        %604 = vmatprep.subr.mxu0 0.0
        %605 = vmatpush1.msra.mxu0 %v554
        %606 = vmatprep.subr.mxu0 0.0
        %607 = vmatpush1.msra.mxu0 %v553
        %608 = vmatprep.subr.mxu0 0.0
        %609 = vmatpush2.msra.mxu0 0.0
        %610 = vmatprep.subr.mxu0 0.0
        %611 = vmatpush2.msra.mxu0 0.0
        %612 = vmatprep.subr.mxu0 0.0
        %613 = vmatpush2.msra.mxu0 0.0
        %614 = vmatprep.subr.mxu0 0.0
        %615 = vmatpush2.msra.mxu0 0.0
        %616 = vmatprep.subr.mxu0 0.0
        %617 = vmatpush2.msra.mxu0 0.0
        %618 = vmatprep.subr.mxu0 0.0
        %619 = vmatpush2.msra.mxu0 0.0
        %620 = vmatprep.subr.mxu0 0.0
        %621 = vmatpush2.msra.mxu0 0.0
        %622 = vmatprep.subr.mxu0 0.0
        %623 = vmatpush2.msra.mxu0 0.0
        %624 = vmatprep.subr.mxu0 0.0
        %625 = vmatpush2.msra.mxu0 0.0
        %626 = vmatprep.subr.mxu0 0.0
        %627 = vmatpush2.msra.mxu0 0.0
        %628 = vmatprep.subr.mxu0 0.0
        %629 = vmatpush2.msra.mxu0 0.0
        %630 = vmatprep.subr.mxu0 0.0
        %631 = vmatpush2.msra.mxu0 0.0
        %632 = vmatprep.subr.mxu0 0.0
        %633 = vmatpush2.msra.mxu0 0.0
        %634 = vmatprep.subr.mxu0 0.0
        %635 = vmatpush2.msra.mxu0 0.0
        %636 = vmatprep.subr.mxu0 0.0
        %637 = vmatpush2.msra.mxu0 0.0
        %638 = vmatprep.subr.mxu0 0.0
        %639 = vmatpush2.msra.mxu0 0.0
        %640 = vmatprep.mubr.f32.mxu0 0.0
        %641 = vmatmul.mubr.f32.gmra.mxu0 %v549
        %v642 = vpop.f32.mrf.mxu0
        %v643 = vadd.f32 %v574, %v642
        %v644 = vpop.f32.mrf.mxu0
        %645 = vmatprep.mubr.f32.mxu0 0.0
        %646 = vmatmul.mubr.f32.gmra.mxu0 %v551
        %v647 = vpop.f32.mrf.mxu0
        %v648 = vadd.f32 %v574, %v647
        %v649 = vpop.f32.mrf.mxu0
        %650 = vdwg.mxu0
        %v651 = vmax.f32 %v643, 0.0
        %v652 = vmax.f32 %v648, 0.0
        %v653 = vld [vmem:[#allocation7] sm:$0xff]
        %v654 = vld [vmem:[#allocation7 + $0x8] sm:$0xff]
        %v655 = vld [vmem:[#allocation7 + $0x10] sm:$0xff]
        %v656 = vld [vmem:[#allocation7 + $0x18] sm:$0xff]
        %v657 = vld [vmem:[#allocation7 + $0x20] sm:$0xff]
        %v658 = vld [vmem:[#allocation7 + $0x28] sm:$0xff]
        %v659 = vld [vmem:[#allocation7 + $0x30] sm:$0xff]
        %v660 = vld [vmem:[#allocation7 + $0x38] sm:$0xff]
        %v661 = vld [vmem:[#allocation7 + $0x40] sm:$0xff]
        %v662 = vld [vmem:[#allocation7 + $0x48] sm:$0xff]
        %v663 = vld [vmem:[#allocation7 + $0x50] sm:$0xff]
        %v664 = vld [vmem:[#allocation7 + $0x58] sm:$0xff]
        %v665 = vld [vmem:[#allocation7 + $0x60] sm:$0xff]
        %v666 = vld [vmem:[#allocation7 + $0x68] sm:$0xff]
        %v667 = vld [vmem:[#allocation7 + $0x70] sm:$0xff]
        %v668 = vld [vmem:[#allocation7 + $0x78] sm:$0xff]
        %v669 = vld [vmem:[%s4] sm:$0x1]
        %v671 = vlaneseq
        %v672 = vshrl.u32 %v671, 7
        %v673 = vsub.s32 0, %v672
        %v674 = vrot.slane %v669, %v673
        %676 = vmatprep.subr.mxu0 0.0
        %677 = vmatpush1.msra.mxu0 %v668
        %678 = vmatprep.subr.mxu0 0.0
        %679 = vmatpush1.msra.mxu0 %v667
        %680 = vmatprep.subr.mxu0 0.0
        %681 = vmatpush1.msra.mxu0 %v666
        %682 = vmatprep.subr.mxu0 0.0
        %683 = vmatpush1.msra.mxu0 %v665
        %684 = vmatprep.subr.mxu0 0.0
        %685 = vmatpush1.msra.mxu0 %v664
        %686 = vmatprep.subr.mxu0 0.0
        %687 = vmatpush1.msra.mxu0 %v663
        %688 = vmatprep.subr.mxu0 0.0
        %689 = vmatpush1.msra.mxu0 %v662
        %690 = vmatprep.subr.mxu0 0.0
        %691 = vmatpush1.msra.mxu0 %v661
        %692 = vmatprep.subr.mxu0 0.0
        %693 = vmatpush1.msra.mxu0 %v660
        %694 = vmatprep.subr.mxu0 0.0
        %695 = vmatpush1.msra.mxu0 %v659
        %696 = vmatprep.subr.mxu0 0.0
        %697 = vmatpush1.msra.mxu0 %v658
        %698 = vmatprep.subr.mxu0 0.0
        %699 = vmatpush1.msra.mxu0 %v657
        %700 = vmatprep.subr.mxu0 0.0
        %701 = vmatpush1.msra.mxu0 %v656
        %702 = vmatprep.subr.mxu0 0.0
        %703 = vmatpush1.msra.mxu0 %v655
        %704 = vmatprep.subr.mxu0 0.0
        %705 = vmatpush1.msra.mxu0 %v654
        %706 = vmatprep.subr.mxu0 0.0
        %707 = vmatpush1.msra.mxu0 %v653
        %708 = vmatprep.subr.mxu0 0.0
        %709 = vmatpush2.msra.mxu0 0.0
        %710 = vmatprep.subr.mxu0 0.0
        %711 = vmatpush2.msra.mxu0 0.0
        %712 = vmatprep.subr.mxu0 0.0
        %713 = vmatpush2.msra.mxu0 0.0
        %714 = vmatprep.subr.mxu0 0.0
        %715 = vmatpush2.msra.mxu0 0.0
        %716 = vmatprep.subr.mxu0 0.0
        %717 = vmatpush2.msra.mxu0 0.0
        %718 = vmatprep.subr.mxu0 0.0
        %719 = vmatpush2.msra.mxu0 0.0
        %720 = vmatprep.subr.mxu0 0.0
        %721 = vmatpush2.msra.mxu0 0.0
        %722 = vmatprep.subr.mxu0 0.0
        %723 = vmatpush2.msra.mxu0 0.0
        %724 = vmatprep.subr.mxu0 0.0
        %725 = vmatpush2.msra.mxu0 0.0
        %726 = vmatprep.subr.mxu0 0.0
        %727 = vmatpush2.msra.mxu0 0.0
        %728 = vmatprep.subr.mxu0 0.0
        %729 = vmatpush2.msra.mxu0 0.0
        %730 = vmatprep.subr.mxu0 0.0
        %731 = vmatpush2.msra.mxu0 0.0
        %732 = vmatprep.subr.mxu0 0.0
        %733 = vmatpush2.msra.mxu0 0.0
        %734 = vmatprep.subr.mxu0 0.0
        %735 = vmatpush2.msra.mxu0 0.0
        %736 = vmatprep.subr.mxu0 0.0
        %737 = vmatpush2.msra.mxu0 0.0
        %738 = vmatprep.subr.mxu0 0.0
        %739 = vmatpush2.msra.mxu0 0.0
        %740 = vmatprep.mubr.f32.mxu0 0.0
        %741 = vmatmul.mubr.f32.gmra.mxu0 %v651
        %v742 = vpop.f32.mrf.mxu0
        %v743 = vadd.f32 %v674, %v742
        %v744 = vpop.f32.mrf.mxu0
        %745 = vmatprep.mubr.f32.mxu0 0.0
        %746 = vmatmul.mubr.f32.gmra.mxu0 %v652
        %v747 = vpop.f32.mrf.mxu0
        %v748 = vadd.f32 %v674, %v747
        %v749 = vpop.f32.mrf.mxu0
        %750 = vdwg.mxu0
        %v751 = vmax.f32 %v743, 0.0
        %v752 = vmax.f32 %v748, 0.0
        %v753 = vld [vmem:[#allocation8] sm:$0xff]
        %v754 = vld [vmem:[#allocation8 + $0x8] sm:$0xff]
        %v755 = vld [vmem:[#allocation8 + $0x10] sm:$0xff]
        %v756 = vld [vmem:[#allocation8 + $0x18] sm:$0xff]
        %v757 = vld [vmem:[#allocation8 + $0x20] sm:$0xff]
        %v758 = vld [vmem:[#allocation8 + $0x28] sm:$0xff]
        %v759 = vld [vmem:[#allocation8 + $0x30] sm:$0xff]
        %v760 = vld [vmem:[#allocation8 + $0x38] sm:$0xff]
        %v761 = vld [vmem:[#allocation8 + $0x40] sm:$0xff]
        %v762 = vld [vmem:[#allocation8 + $0x48] sm:$0xff]
        %v763 = vld [vmem:[#allocation8 + $0x50] sm:$0xff]
        %v764 = vld [vmem:[#allocation8 + $0x58] sm:$0xff]
        %v765 = vld [vmem:[#allocation8 + $0x60] sm:$0xff]
        %v766 = vld [vmem:[#allocation8 + $0x68] sm:$0xff]
        %v767 = vld [vmem:[#allocation8 + $0x70] sm:$0xff]
        %v768 = vld [vmem:[#allocation8 + $0x78] sm:$0xff]
        %v769 = vld [vmem:[#allocation8 + $0x80] sm:$0xff]
        %v770 = vld [vmem:[#allocation8 + $0x88] sm:$0xff]
        %v771 = vld [vmem:[#allocation8 + $0x90] sm:$0xff]
        %v772 = vld [vmem:[#allocation8 + $0x98] sm:$0xff]
        %v773 = vld [vmem:[#allocation8 + $0xa0] sm:$0xff]
        %v774 = vld [vmem:[#allocation8 + $0xa8] sm:$0xff]
        %v775 = vld [vmem:[#allocation8 + $0xb0] sm:$0xff]
        %v776 = vld [vmem:[#allocation8 + $0xb8] sm:$0xff]
        %v777 = vld [vmem:[#allocation8 + $0xc0] sm:$0xff]
        %v778 = vld [vmem:[#allocation8 + $0xc8] sm:$0xff]
        %v779 = vld [vmem:[#allocation8 + $0xd0] sm:$0xff]
        %v780 = vld [vmem:[#allocation8 + $0xd8] sm:$0xff]
        %v781 = vld [vmem:[#allocation8 + $0xe0] sm:$0xff]
        %v782 = vld [vmem:[#allocation8 + $0xe8] sm:$0xff]
        %v783 = vld [vmem:[#allocation8 + $0xf0] sm:$0xff]
        %v784 = vld [vmem:[#allocation8 + $0xf8] sm:$0xff]
        %v785 = vld [vmem:[%s6] sm:$0x3]
        %v787 = vlaneseq
        %v788 = vshrl.u32 %v787, 7
        %v789 = vsub.s32 0, %v788
        %v790 = vrot.slane %v785, %v789
        %v791 = vlaneseq
        %v792 = vshrl.u32 %v791, 7
        %v793 = vsub.s32 1, %v792
        %v794 = vrot.slane %v785, %v793
        %797 = vmatprep.subr.mxu0 %v784
        %798 = vmatpush1.msra.mxu0 %v783
        %799 = vmatprep.subr.mxu0 %v782
        %800 = vmatpush1.msra.mxu0 %v781
        %801 = vmatprep.subr.mxu0 %v780
        %802 = vmatpush1.msra.mxu0 %v779
        %803 = vmatprep.subr.mxu0 %v778
        %804 = vmatpush1.msra.mxu0 %v777
        %805 = vmatprep.subr.mxu0 %v776
        %806 = vmatpush1.msra.mxu0 %v775
        %807 = vmatprep.subr.mxu0 %v774
        %808 = vmatpush1.msra.mxu0 %v773
        %809 = vmatprep.subr.mxu0 %v772
        %810 = vmatpush1.msra.mxu0 %v771
        %811 = vmatprep.subr.mxu0 %v770
        %812 = vmatpush1.msra.mxu0 %v769
        %813 = vmatprep.subr.mxu0 %v768
        %814 = vmatpush1.msra.mxu0 %v767
        %815 = vmatprep.subr.mxu0 %v766
        %816 = vmatpush1.msra.mxu0 %v765
        %817 = vmatprep.subr.mxu0 %v764
        %818 = vmatpush1.msra.mxu0 %v763
        %819 = vmatprep.subr.mxu0 %v762
        %820 = vmatpush1.msra.mxu0 %v761
        %821 = vmatprep.subr.mxu0 %v760
        %822 = vmatpush1.msra.mxu0 %v759
        %823 = vmatprep.subr.mxu0 %v758
        %824 = vmatpush1.msra.mxu0 %v757
        %825 = vmatprep.subr.mxu0 %v756
        %826 = vmatpush1.msra.mxu0 %v755
        %827 = vmatprep.subr.mxu0 %v754
        %828 = vmatpush1.msra.mxu0 %v753
        %829 = vmatprep.subr.mxu0 0.0
        %830 = vmatpush2.msra.mxu0 0.0
        %831 = vmatprep.subr.mxu0 0.0
        %832 = vmatpush2.msra.mxu0 0.0
        %833 = vmatprep.subr.mxu0 0.0
        %834 = vmatpush2.msra.mxu0 0.0
        %835 = vmatprep.subr.mxu0 0.0
        %836 = vmatpush2.msra.mxu0 0.0
        %837 = vmatprep.subr.mxu0 0.0
        %838 = vmatpush2.msra.mxu0 0.0
        %839 = vmatprep.subr.mxu0 0.0
        %840 = vmatpush2.msra.mxu0 0.0
        %841 = vmatprep.subr.mxu0 0.0
        %842 = vmatpush2.msra.mxu0 0.0
        %843 = vmatprep.subr.mxu0 0.0
        %844 = vmatpush2.msra.mxu0 0.0
        %845 = vmatprep.subr.mxu0 0.0
        %846 = vmatpush2.msra.mxu0 0.0
        %847 = vmatprep.subr.mxu0 0.0
        %848 = vmatpush2.msra.mxu0 0.0
        %849 = vmatprep.subr.mxu0 0.0
        %850 = vmatpush2.msra.mxu0 0.0
        %851 = vmatprep.subr.mxu0 0.0
        %852 = vmatpush2.msra.mxu0 0.0
        %853 = vmatprep.subr.mxu0 0.0
        %854 = vmatpush2.msra.mxu0 0.0
        %855 = vmatprep.subr.mxu0 0.0
        %856 = vmatpush2.msra.mxu0 0.0
        %857 = vmatprep.subr.mxu0 0.0
        %858 = vmatpush2.msra.mxu0 0.0
        %859 = vmatprep.subr.mxu0 0.0
        %860 = vmatpush2.msra.mxu0 0.0
        %861 = vmatprep.mubr.f32.mxu0 0.0
        %862 = vmatmul.mubr.f32.gmra.mxu0 %v751
        %v863 = vpop.f32.mrf.mxu0
        %v864 = vadd.f32 %v790, %v863
        %v865 = vpop.f32.mrf.mxu0
        %v866 = vadd.f32 %v794, %v865
        %867 = vmatprep.mubr.f32.mxu0 0.0
        %868 = vmatmul.mubr.f32.gmra.mxu0 %v752
        %v869 = vpop.f32.mrf.mxu0
        %v870 = vadd.f32 %v790, %v869
        %v871 = vpop.f32.mrf.mxu0
        %v872 = vadd.f32 %v794, %v871
        %873 = vdwg.mxu0
        %v874 = vmul.f32 %v866, 0.5
        %v875 = vmul.f32 %v872, 0.5
        %v876 = vmul.f32 %v874, 1.442695
        %v877 = vpow.pop %v876
        %v878 = vmul.f32 %v875, 1.442695
        %v879 = vpow.pop %v878
        %v880 = vmul.f32 %v550, %v877
        %v881 = vmul.f32 %v552, %v879
        %v882 = vadd.f32 %v880, %v864
        %v883 = vadd.f32 %v881, %v870
        %v884 = vld [vmem:[#allocation10] sm:$0xff]
        %v885 = vld [vmem:[#allocation10 + $0x8] sm:$0xff]
        %v886 = vld [vmem:[#allocation10 + $0x10] sm:$0xff]
        %v887 = vld [vmem:[#allocation10 + $0x18] sm:$0xff]
        %v888 = vld [vmem:[#allocation10 + $0x20] sm:$0xff]
        %v889 = vld [vmem:[#allocation10 + $0x28] sm:$0xff]
        %v890 = vld [vmem:[#allocation10 + $0x30] sm:$0xff]
        %v891 = vld [vmem:[#allocation10 + $0x38] sm:$0xff]
        %v892 = vld [vmem:[#allocation10 + $0x40] sm:$0xff]
        %v893 = vld [vmem:[#allocation10 + $0x48] sm:$0xff]
        %v894 = vld [vmem:[#allocation10 + $0x50] sm:$0xff]
        %v895 = vld [vmem:[#allocation10 + $0x58] sm:$0xff]
        %v896 = vld [vmem:[#allocation10 + $0x60] sm:$0xff]
        %v897 = vld [vmem:[#allocation10 + $0x68] sm:$0xff]
        %v898 = vld [vmem:[#allocation10 + $0x70] sm:$0xff]
        %v899 = vld [vmem:[#allocation10 + $0x78] sm:$0xff]
        %v900 = vld [vmem:[%s8] sm:$0x1]
        %v902 = vlaneseq
        %v903 = vshrl.u32 %v902, 7
        %v904 = vsub.s32 0, %v903
        %v905 = vrot.slane %v900, %v904
        %907 = vmatprep.subr.mxu0 0.0
        %908 = vmatpush1.msra.mxu0 %v899
        %909 = vmatprep.subr.mxu0 0.0
        %910 = vmatpush1.msra.mxu0 %v898
        %911 = vmatprep.subr.mxu0 0.0
        %912 = vmatpush1.msra.mxu0 %v897
        %913 = vmatprep.subr.mxu0 0.0
        %914 = vmatpush1.msra.mxu0 %v896
        %915 = vmatprep.subr.mxu0 0.0
        %916 = vmatpush1.msra.mxu0 %v895
        %917 = vmatprep.subr.mxu0 0.0
        %918 = vmatpush1.msra.mxu0 %v894
        %919 = vmatprep.subr.mxu0 0.0
        %920 = vmatpush1.msra.mxu0 %v893
        %921 = vmatprep.subr.mxu0 0.0
        %922 = vmatpush1.msra.mxu0 %v892
        %923 = vmatprep.subr.mxu0 0.0
        %924 = vmatpush1.msra.mxu0 %v891
        %925 = vmatprep.subr.mxu0 0.0
        %926 = vmatpush1.msra.mxu0 %v890
        %927 = vmatprep.subr.mxu0 0.0
        %928 = vmatpush1.msra.mxu0 %v889
        %929 = vmatprep.subr.mxu0 0.0
        %930 = vmatpush1.msra.mxu0 %v888
        %931 = vmatprep.subr.mxu0 0.0
        %932 = vmatpush1.msra.mxu0 %v887
        %933 = vmatprep.subr.mxu0 0.0
        %934 = vmatpush1.msra.mxu0 %v886
        %935 = vmatprep.subr.mxu0 0.0
        %936 = vmatpush1.msra.mxu0 %v885
        %937 = vmatprep.subr.mxu0 0.0
        %938 = vmatpush1.msra.mxu0 %v884
        %939 = vmatprep.subr.mxu0 0.0
        %940 = vmatpush2.msra.mxu0 0.0
        %941 = vmatprep.subr.mxu0 0.0
        %942 = vmatpush2.msra.mxu0 0.0
        %943 = vmatprep.subr.mxu0 0.0
        %944 = vmatpush2.msra.mxu0 0.0
        %945 = vmatprep.subr.mxu0 0.0
        %946 = vmatpush2.msra.mxu0 0.0
        %947 = vmatprep.subr.mxu0 0.0
        %948 = vmatpush2.msra.mxu0 0.0
        %949 = vmatprep.subr.mxu0 0.0
        %950 = vmatpush2.msra.mxu0 0.0
        %951 = vmatprep.subr.mxu0 0.0
        %952 = vmatpush2.msra.mxu0 0.0
        %953 = vmatprep.subr.mxu0 0.0
        %954 = vmatpush2.msra.mxu0 0.0
        %955 = vmatprep.subr.mxu0 0.0
        %956 = vmatpush2.msra.mxu0 0.0
        %957 = vmatprep.subr.mxu0 0.0
        %958 = vmatpush2.msra.mxu0 0.0
        %959 = vmatprep.subr.mxu0 0.0
        %960 = vmatpush2.msra.mxu0 0.0
        %961 = vmatprep.subr.mxu0 0.0
        %962 = vmatpush2.msra.mxu0 0.0
        %963 = vmatprep.subr.mxu0 0.0
        %964 = vmatpush2.msra.mxu0 0.0
        %965 = vmatprep.subr.mxu0 0.0
        %966 = vmatpush2.msra.mxu0 0.0
        %967 = vmatprep.subr.mxu0 0.0
        %968 = vmatpush2.msra.mxu0 0.0
        %969 = vmatprep.subr.mxu0 0.0
        %970 = vmatpush2.msra.mxu0 0.0
        %971 = vmatprep.mubr.f32.mxu0 0.0
        %972 = vmatmul.mubr.f32.gmra.mxu0 %v882
        %v973 = vpop.f32.mrf.mxu0
        %v974 = vadd.f32 %v905, %v973
        %v975 = vpop.f32.mrf.mxu0
        %976 = vmatprep.mubr.f32.mxu0 0.0
        %977 = vmatmul.mubr.f32.gmra.mxu0 %v883
        %v978 = vpop.f32.mrf.mxu0
        %v979 = vadd.f32 %v905, %v978
        %v980 = vpop.f32.mrf.mxu0
        %981 = vdwg.mxu0
        %v982 = vmax.f32 %v974, 0.0
        %v983 = vmax.f32 %v979, 0.0
        %v984 = vld [vmem:[#allocation11] sm:$0xff]
        %v985 = vld [vmem:[#allocation11 + $0x8] sm:$0xff]
        %v986 = vld [vmem:[#allocation11 + $0x10] sm:$0xff]
        %v987 = vld [vmem:[#allocation11 + $0x18] sm:$0xff]
        %v988 = vld [vmem:[#allocation11 + $0x20] sm:$0xff]
        %v989 = vld [vmem:[#allocation11 + $0x28] sm:$0xff]
        %v990 = vld [vmem:[#allocation11 + $0x30] sm:$0xff]
        %v991 = vld [vmem:[#allocation11 + $0x38] sm:$0xff]
        %v992 = vld [vmem:[#allocation11 + $0x40] sm:$0xff]
        %v993 = vld [vmem:[#allocation11 + $0x48] sm:$0xff]
        %v994 = vld [vmem:[#allocation11 + $0x50] sm:$0xff]
        %v995 = vld [vmem:[#allocation11 + $0x58] sm:$0xff]
        %v996 = vld [vmem:[#allocation11 + $0x60] sm:$0xff]
        %v997 = vld [vmem:[#allocation11 + $0x68] sm:$0xff]
        %v998 = vld [vmem:[#allocation11 + $0x70] sm:$0xff]
        %v999 = vld [vmem:[#allocation11 + $0x78] sm:$0xff]
        %v1000 = vld [vmem:[%s10] sm:$0x1]
        %v1002 = vlaneseq
        %v1003 = vshrl.u32 %v1002, 7
        %v1004 = vsub.s32 0, %v1003
        %v1005 = vrot.slane %v1000, %v1004
        %1007 = vmatprep.subr.mxu0 0.0
        %1008 = vmatpush1.msra.mxu0 %v999
        %1009 = vmatprep.subr.mxu0 0.0
        %1010 = vmatpush1.msra.mxu0 %v998
        %1011 = vmatprep.subr.mxu0 0.0
        %1012 = vmatpush1.msra.mxu0 %v997
        %1013 = vmatprep.subr.mxu0 0.0
        %1014 = vmatpush1.msra.mxu0 %v996
        %1015 = vmatprep.subr.mxu0 0.0
        %1016 = vmatpush1.msra.mxu0 %v995
        %1017 = vmatprep.subr.mxu0 0.0
        %1018 = vmatpush1.msra.mxu0 %v994
        %1019 = vmatprep.subr.mxu0 0.0
        %1020 = vmatpush1.msra.mxu0 %v993
        %1021 = vmatprep.subr.mxu0 0.0
        %1022 = vmatpush1.msra.mxu0 %v992
        %1023 = vmatprep.subr.mxu0 0.0
        %1024 = vmatpush1.msra.mxu0 %v991
        %1025 = vmatprep.subr.mxu0 0.0
        %1026 = vmatpush1.msra.mxu0 %v990
        %1027 = vmatprep.subr.mxu0 0.0
        %1028 = vmatpush1.msra.mxu0 %v989
        %1029 = vmatprep.subr.mxu0 0.0
        %1030 = vmatpush1.msra.mxu0 %v988
        %1031 = vmatprep.subr.mxu0 0.0
        %1032 = vmatpush1.msra.mxu0 %v987
        %1033 = vmatprep.subr.mxu0 0.0
        %1034 = vmatpush1.msra.mxu0 %v986
        %1035 = vmatprep.subr.mxu0 0.0
        %1036 = vmatpush1.msra.mxu0 %v985
        %1037 = vmatprep.subr.mxu0 0.0
        %1038 = vmatpush1.msra.mxu0 %v984
        %1039 = vmatprep.subr.mxu0 0.0
        %1040 = vmatpush2.msra.mxu0 0.0
        %1041 = vmatprep.subr.mxu0 0.0
        %1042 = vmatpush2.msra.mxu0 0.0
        %1043 = vmatprep.subr.mxu0 0.0
        %1044 = vmatpush2.msra.mxu0 0.0
        %1045 = vmatprep.subr.mxu0 0.0
        %1046 = vmatpush2.msra.mxu0 0.0
        %1047 = vmatprep.subr.mxu0 0.0
        %1048 = vmatpush2.msra.mxu0 0.0
        %1049 = vmatprep.subr.mxu0 0.0
        %1050 = vmatpush2.msra.mxu0 0.0
        %1051 = vmatprep.subr.mxu0 0.0
        %1052 = vmatpush2.msra.mxu0 0.0
        %1053 = vmatprep.subr.mxu0 0.0
        %1054 = vmatpush2.msra.mxu0 0.0
        %1055 = vmatprep.subr.mxu0 0.0
        %1056 = vmatpush2.msra.mxu0 0.0
        %1057 = vmatprep.subr.mxu0 0.0
        %1058 = vmatpush2.msra.mxu0 0.0
        %1059 = vmatprep.subr.mxu0 0.0
        %1060 = vmatpush2.msra.mxu0 0.0
        %1061 = vmatprep.subr.mxu0 0.0
        %1062 = vmatpush2.msra.mxu0 0.0
        %1063 = vmatprep.subr.mxu0 0.0
        %1064 = vmatpush2.msra.mxu0 0.0
        %1065 = vmatprep.subr.mxu0 0.0
        %1066 = vmatpush2.msra.mxu0 0.0
        %1067 = vmatprep.subr.mxu0 0.0
        %1068 = vmatpush2.msra.mxu0 0.0
        %1069 = vmatprep.subr.mxu0 0.0
        %1070 = vmatpush2.msra.mxu0 0.0
        %1071 = vmatprep.mubr.f32.mxu0 0.0
        %1072 = vmatmul.mubr.f32.gmra.mxu0 %v982
        %v1073 = vpop.f32.mrf.mxu0
        %v1074 = vadd.f32 %v1005, %v1073
        %v1075 = vpop.f32.mrf.mxu0
        %1076 = vmatprep.mubr.f32.mxu0 0.0
        %1077 = vmatmul.mubr.f32.gmra.mxu0 %v983
        %v1078 = vpop.f32.mrf.mxu0
        %v1079 = vadd.f32 %v1005, %v1078
        %v1080 = vpop.f32.mrf.mxu0
        %1081 = vdwg.mxu0
        %v1082 = vmax.f32 %v1074, 0.0
        %v1083 = vmax.f32 %v1079, 0.0
        %v1084 = vld [vmem:[#allocation13] sm:$0xff]
        %v1085 = vld [vmem:[#allocation13 + $0x8] sm:$0xff]
        %v1086 = vld [vmem:[#allocation13 + $0x10] sm:$0xff]
        %v1087 = vld [vmem:[#allocation13 + $0x18] sm:$0xff]
        %v1088 = vld [vmem:[#allocation13 + $0x20] sm:$0xff]
        %v1089 = vld [vmem:[#allocation13 + $0x28] sm:$0xff]
        %v1090 = vld [vmem:[#allocation13 + $0x30] sm:$0xff]
        %v1091 = vld [vmem:[#allocation13 + $0x38] sm:$0xff]
        %v1092 = vld [vmem:[#allocation13 + $0x40] sm:$0xff]
        %v1093 = vld [vmem:[#allocation13 + $0x48] sm:$0xff]
        %v1094 = vld [vmem:[#allocation13 + $0x50] sm:$0xff]
        %v1095 = vld [vmem:[#allocation13 + $0x58] sm:$0xff]
        %v1096 = vld [vmem:[#allocation13 + $0x60] sm:$0xff]
        %v1097 = vld [vmem:[#allocation13 + $0x68] sm:$0xff]
        %v1098 = vld [vmem:[#allocation13 + $0x70] sm:$0xff]
        %v1099 = vld [vmem:[#allocation13 + $0x78] sm:$0xff]
        %v1100 = vld [vmem:[%s12] sm:$0x1]
        %v1102 = vlaneseq
        %v1103 = vshrl.u32 %v1102, 7
        %v1104 = vsub.s32 0, %v1103
        %v1105 = vrot.slane %v1100, %v1104
        %1107 = vmatprep.subr.mxu0 0.0
        %1108 = vmatpush1.msra.mxu0 %v1099
        %1109 = vmatprep.subr.mxu0 0.0
        %1110 = vmatpush1.msra.mxu0 %v1098
        %1111 = vmatprep.subr.mxu0 0.0
        %1112 = vmatpush1.msra.mxu0 %v1097
        %1113 = vmatprep.subr.mxu0 0.0
        %1114 = vmatpush1.msra.mxu0 %v1096
        %1115 = vmatprep.subr.mxu0 0.0
        %1116 = vmatpush1.msra.mxu0 %v1095
        %1117 = vmatprep.subr.mxu0 0.0
        %1118 = vmatpush1.msra.mxu0 %v1094
        %1119 = vmatprep.subr.mxu0 0.0
        %1120 = vmatpush1.msra.mxu0 %v1093
        %1121 = vmatprep.subr.mxu0 0.0
        %1122 = vmatpush1.msra.mxu0 %v1092
        %1123 = vmatprep.subr.mxu0 0.0
        %1124 = vmatpush1.msra.mxu0 %v1091
        %1125 = vmatprep.subr.mxu0 0.0
        %1126 = vmatpush1.msra.mxu0 %v1090
        %1127 = vmatprep.subr.mxu0 0.0
        %1128 = vmatpush1.msra.mxu0 %v1089
        %1129 = vmatprep.subr.mxu0 0.0
        %1130 = vmatpush1.msra.mxu0 %v1088
        %1131 = vmatprep.subr.mxu0 0.0
        %1132 = vmatpush1.msra.mxu0 %v1087
        %1133 = vmatprep.subr.mxu0 0.0
        %1134 = vmatpush1.msra.mxu0 %v1086
        %1135 = vmatprep.subr.mxu0 0.0
        %1136 = vmatpush1.msra.mxu0 %v1085
        %1137 = vmatprep.subr.mxu0 0.0
        %1138 = vmatpush1.msra.mxu0 %v1084
        %1139 = vmatprep.subr.mxu0 0.0
        %1140 = vmatpush2.msra.mxu0 0.0
        %1141 = vmatprep.subr.mxu0 0.0
        %1142 = vmatpush2.msra.mxu0 0.0
        %1143 = vmatprep.subr.mxu0 0.0
        %1144 = vmatpush2.msra.mxu0 0.0
        %1145 = vmatprep.subr.mxu0 0.0
        %1146 = vmatpush2.msra.mxu0 0.0
        %1147 = vmatprep.subr.mxu0 0.0
        %1148 = vmatpush2.msra.mxu0 0.0
        %1149 = vmatprep.subr.mxu0 0.0
        %1150 = vmatpush2.msra.mxu0 0.0
        %1151 = vmatprep.subr.mxu0 0.0
        %1152 = vmatpush2.msra.mxu0 0.0
        %1153 = vmatprep.subr.mxu0 0.0
        %1154 = vmatpush2.msra.mxu0 0.0
        %1155 = vmatprep.subr.mxu0 0.0
        %1156 = vmatpush2.msra.mxu0 0.0
        %1157 = vmatprep.subr.mxu0 0.0
        %1158 = vmatpush2.msra.mxu0 0.0
        %1159 = vmatprep.subr.mxu0 0.0
        %1160 = vmatpush2.msra.mxu0 0.0
        %1161 = vmatprep.subr.mxu0 0.0
        %1162 = vmatpush2.msra.mxu0 0.0
        %1163 = vmatprep.subr.mxu0 0.0
        %1164 = vmatpush2.msra.mxu0 0.0
        %1165 = vmatprep.subr.mxu0 0.0
        %1166 = vmatpush2.msra.mxu0 0.0
        %1167 = vmatprep.subr.mxu0 0.0
        %1168 = vmatpush2.msra.mxu0 0.0
        %1169 = vmatprep.subr.mxu0 0.0
        %1170 = vmatpush2.msra.mxu0 0.0
        %1171 = vmatprep.mubr.f32.mxu0 0.0
        %1172 = vmatmul.mubr.f32.gmra.mxu0 %v1082
        %v1173 = vpop.f32.mrf.mxu0
        %v1174 = vadd.f32 %v1105, %v1173
        %v1175 = vpop.f32.mrf.mxu0
        %1176 = vmatprep.mubr.f32.mxu0 0.0
        %1177 = vmatmul.mubr.f32.gmra.mxu0 %v1083
        %v1178 = vpop.f32.mrf.mxu0
        %v1179 = vadd.f32 %v1105, %v1178
        %v1180 = vpop.f32.mrf.mxu0
        %1181 = vdwg.mxu0
        %v1182 = vxor.u32 %v1174, 2147483648
        %v1183 = vxor.u32 %v1179, 2147483648
        %v1184 = vmul.f32 %v1182, 1.442695
        %v1185 = vpow.pop %v1184
        %v1186 = vmul.f32 %v1183, 1.442695
        %v1187 = vpow.pop %v1186
        %v1188 = vadd.f32 %v1185, 1.0
        %v1189 = vadd.f32 %v1187, 1.0
        %v1190 = vrcp.pop %v1188
        %v1191 = vmul.f32 1.0, %v1190
        %v1192 = vrcp.pop %v1189
        %v1193 = vmul.f32 1.0, %v1192
        %1194 = vst [vmem:[%s546] sm:$0xff] %v864
        %1195 = vst [vmem:[%s546 + $0x20] sm:$0xff] %v870
        %1196 = vst [vmem:[%s546 + $0x8] sm:$0xff] %v866
        %1197 = vst [vmem:[%s546 + $0x28] sm:$0xff] %v872
        %1198 = vst [vmem:[%s546 + $0x10] sm:$0xff] %v882
        %1199 = vst [vmem:[%s546 + $0x30] sm:$0xff] %v883
        %1200 = vst [vmem:[%s546 + $0x18] sm:$0xff] %v1191
        %1201 = vst [vmem:[%s546 + $0x38] sm:$0xff] %v1193
        %s1202 = sand.u32 %s319, 1
        %s1203 = scalar_lea.sflag [#allocation4], %s1202
        %s1204 = sand.u32 %s319, 1
        %s1205 = smul.addr %s1204, 64
        %s1206 = scalar_lea.vmem [#allocation14], %s1205
        // Predicated region
        $region101: #{tpu_custom_call.1} parent=71 // pred_check
          %p1207 = pneg %p329
        $region102: #{tpu_custom_call.1} parent=71 // pred_check_branch
          %1209 = sbr.rel (%p1207) target = $region104
        $region103: #{tpu_custom_call.1} parent=71 // pred_region
          %s1210 = smul.u32 2, %s33
          %s1212 = ssub.s32 1024, 1024
          %1213 = vsyncadd %s1203, %s1212
          %s1214 = smul.addr %s1210, 4
          %s1215 = smul.addr %s1214, 128
          %s1216 = scalar_lea.hbm %s13, %s1215
          %s1217 = sshll.u32 %s1206, 4
          %s1218 = int_to_ptr.vmem [resolvable:$true] %s1217
          %1223 = dma.vmem_to_hbm [thread:$0]  %s1218, 1024, %s1216, %s1203, 512, 512, 32
        $region104: #{tpu_custom_call.1} parent=71 // pred_fallthru
          _
      $region72: #{tpu_custom_call.1} parent=5 // pred_fallthru
        _
      %p1224 = scmp.le.s32.totalorder 2, %s28
      // Predicated region
      $region105: #{tpu_custom_call.1} parent=5 // pred_check
        %p1225 = pneg %p1224
      $region106: #{tpu_custom_call.1} parent=5 // pred_check_branch
        %1227 = sbr.rel (%p1225) target = $region108
      $region107: #{tpu_custom_call.1} parent=5 // pred_region
        %s1228 = ssub.s32 %s28, 2
        // Predicated region
        $region109: #{tpu_custom_call.1} parent=107 // pred_check
          %p1229 = pneg %p335
        $region110: #{tpu_custom_call.1} parent=107 // pred_check_branch
          %1231 = sbr.rel (%p1229) target = $region112
        $region111: #{tpu_custom_call.1} parent=107 // pred_region
          %s1232 = sand.u32 %s320, 1
          %s1233 = scalar_lea.sflag [#allocation4], %s1232
          %s1234 = sand.u32 %s320, 1
          %s1235 = smul.addr %s1234, 64
          %s1236 = scalar_lea.vmem [#allocation14], %s1235
          %1237 = dma.done %s1233, 1024
        $region112: #{tpu_custom_call.1} parent=107 // pred_fallthru
          _
      $region108: #{tpu_custom_call.1} parent=5 // pred_fallthru
        _
    $region6: #{tpu_custom_call.1} parent=1 // loop_footer
      %s32 = sadd.s32 1, %s28
    $region7: #{tpu_custom_call.1} parent=1 // loop_footer_branch
      %27 = sbr.rel target = $region3
    $region8: #{tpu_custom_call.1} parent=1 // loop_exit
      _
    %1238 = vsyncpa [#allocation3], 1
    %s1239 = scalar_lea.sflag [#allocation3], 1
    %1240 = vsyncpa %s1239, 1
    %1241 = vsyncpa [#allocation6], 1
    %1242 = vsyncpa [#allocation9], 1
    %1243 = vsyncpa [#allocation12], 1
    %1244 = vsyncpa [#allocation4], 1
    %s1245 = scalar_lea.sflag [#allocation4], 1
    %1246 = vsyncpa %s1245, 1

</llo_original>
